<compile_context>
chip_gen: v7x
topology: tpu7x:2x2x1
jax: 0.10.0
libtpu: 0.0.40
codegen_flags: <defaults>
</compile_context>

<pallas_src>
import jax
import jax.numpy as jnp
from jax import lax
from jax.experimental import pallas as pl
from jax.experimental.pallas import tpu as pltpu


def _round_up(n, m):
    return ((n + m - 1) // m) * m


def lstm_kernel(x_ref, wih_ref, whh_ref, b_ref, wfc_ref, bfc_ref, out_ref,
                gx_scr):
    # x_ref:   (T, B_blk, Dp)     time-major input block
    # wih_ref: (Dp, 4*Hp)         gate-blocked, lane-aligned
    # whh_ref: (Hp, 4*Hp)
    # b_ref:   (1, 4*Hp)          b_ih + b_hh, gate-blocked
    # wfc_ref: (Hp, FCp)          FC weight, column 0 valid
    # bfc_ref: (1, FCp)           FC bias, column 0 valid
    # out_ref: (B_blk, FCp)       lane-dense fused FC output
    # gx_scr:  (T, B_blk, 4*Hp)   hoisted input projection
    T, B, Dp = x_ref.shape
    Hp = whh_ref.shape[0]

    # ---- Hoisted input projection: ONE big MXU matmul for all timesteps ----
    x_all = x_ref[...].reshape(T * B, Dp)
    gx = jnp.dot(x_all, wih_ref[...],
                 preferred_element_type=jnp.float32) + b_ref[...]
    gx_scr[...] = gx.reshape(T, B, 4 * Hp)

    def sigmoid(v):
        # single EUP tanh per gate instead of exp + reciprocal
        return 0.5 * jnp.tanh(0.5 * v) + 0.5

    def step(t, carry):
        h_prev, c_prev = carry
        # Only the recurrent matmul stays on the sequential critical path;
        # W_hh is read straight from VMEM into the MXU (CSE'd across the
        # unrolled steps, no 64-vreg live range forced).
        gates = gx_scr[t] + jnp.dot(h_prev, whh_ref[...],
                                    preferred_element_type=jnp.float32)
        # Lane-aligned gate slices (Hp is a multiple of 128).
        i = sigmoid(gates[:, 0 * Hp:1 * Hp])
        f = sigmoid(gates[:, 1 * Hp:2 * Hp])
        g = jnp.tanh(gates[:, 2 * Hp:3 * Hp])
        o = sigmoid(gates[:, 3 * Hp:4 * Hp])
        c_new = f * c_prev + i * g
        h_new = o * jnp.tanh(c_new)
        return (h_new, c_new)

    h0 = jnp.zeros((B, Hp), jnp.float32)
    c0 = jnp.zeros((B, Hp), jnp.float32)
    # Fully unrolled: short fixed trip count -> scheduler sees across steps;
    # h/c stay in vregs as loop carries.
    h_T, _ = lax.fori_loop(0, T, step, (h0, c0), unroll=True)

    # ---- Fused final Linear: lane-dense (B_blk, FCp) store, col 0 valid ----
    out_ref[...] = (jnp.dot(h_T, wfc_ref[...],
                            preferred_element_type=jnp.float32)
                    + bfc_ref[...])


def lstm_forward(x, params, *, b_blk=8):
    """x: (B, T, D) float32 (batch_first).  Returns (B, 1) float32."""
    w_ih, w_hh, b_ih, b_hh, w_fc, b_fc = params
    B, T, D = x.shape
    H = w_hh.shape[1]  # w_hh: (4H, H)

    Hp = _round_up(H, 128)      # lane-aligned hidden size
    Dp = _round_up(D, 128)      # lane-aligned input size
    Bp = _round_up(B, b_blk)    # sublane-aligned batch (b_blk multiple of 8)
    FCp = 128                   # lane-padded FC output width

    # Time-major, zero-padded input: (T, Bp, Dp).
    x_tm = jnp.transpose(x, (1, 0, 2)).astype(jnp.float32)
    x_p = jnp.zeros((T, Bp, Dp), jnp.float32).at[:, :B, :D].set(x_tm)

    # Gate-blocked, lane-aligned weights: gate k occupies cols [k*Hp, k*Hp+H).
    def pack_gates(w, rows, rows_p):
        out = jnp.zeros((rows_p, 4 * Hp), jnp.float32)
        for k in range(4):
            out = out.at[:rows, k * Hp:k * Hp + H].set(
                w[k * H:(k + 1) * H, :].T)
        return out

    wih_p = pack_gates(w_ih, D, Dp)          # (Dp, 4*Hp)
    whh_p = pack_gates(w_hh, H, Hp)          # (Hp, 4*Hp)
    bias = b_ih + b_hh
    b_p = jnp.zeros((1, 4 * Hp), jnp.float32)
    for k in range(4):
        b_p = b_p.at[0, k * Hp:k * Hp + H].set(bias[k * H:(k + 1) * H])

    # FC weight/bias packed lane-dense; only column 0 is meaningful.
    wfc_p = jnp.zeros((Hp, FCp), jnp.float32).at[:H, 0].set(w_fc[0, :])
    bfc_p = jnp.zeros((1, FCp), jnp.float32).at[0, 0].set(b_fc[0])

    n_b = Bp // b_blk  # batch blocks; >1 lets v7x's 2 TCs split the work

    fc_out = pl.pallas_call(
        lstm_kernel,
        out_shape=jax.ShapeDtypeStruct((Bp, FCp), jnp.float32),
        grid_spec=pltpu.PrefetchScalarGridSpec(
            num_scalar_prefetch=0,
            grid=(n_b,),
            in_specs=[
                pl.BlockSpec((T, b_blk, Dp), lambda b: (0, b, 0)),   # x block
                pl.BlockSpec((Dp, 4 * Hp), lambda b: (0, 0)),        # W_ih
                pl.BlockSpec((Hp, 4 * Hp), lambda b: (0, 0)),        # W_hh
                pl.BlockSpec((1, 4 * Hp), lambda b: (0, 0)),         # bias
                pl.BlockSpec((Hp, FCp), lambda b: (0, 0)),           # W_fc
                pl.BlockSpec((1, FCp), lambda b: (0, 0)),            # b_fc
            ],
            out_specs=pl.BlockSpec((b_blk, FCp), lambda b: (b, 0)),  # fc out
            scratch_shapes=[
                pltpu.VMEM((T, b_blk, 4 * Hp), jnp.float32),  # hoisted gates_x
            ],
        ),
        compiler_params=pltpu.CompilerParams(
            dimension_semantics=("parallel",),
        ),
    )(x_p, wih_p, whh_p, b_p, wfc_p, bfc_p)

    return fc_out[:B, :1]                              # (B, 1)


def reference_forward(x, params):
    """Pure-JAX reference of the same PyTorch semantics."""
    w_ih, w_hh, b_ih, b_hh, w_fc, b_fc = params
    B, T, D = x.shape
    H = w_hh.shape[1]
    h = jnp.zeros((B, H), jnp.float32)
    c = jnp.zeros((B, H), jnp.float32)
    for t in range(T):
        gates = x[:, t] @ w_ih.T + b_ih + h @ w_hh.T + b_hh
        i = jax.nn.sigmoid(gates[:, 0 * H:1 * H])
        f = jax.nn.sigmoid(gates[:, 1 * H:2 * H])
        g = jnp.tanh(gates[:, 2 * H:3 * H])
        o = jax.nn.sigmoid(gates[:, 3 * H:4 * H])
        c = f * c + i * g
        h = o * jnp.tanh(c)
    return h @ w_fc.T + b_fc


if __name__ == "__main__":
    # batch, seq, lstm_input, hidden_size (module default hidden_size=50)
    B, T, D, H = 2, 8, 16, 50

    key = jax.random.PRNGKey(0)
    ks = jax.random.split(key, 7)
    bound = 1.0 / float(jnp.sqrt(H))
    w_ih = jax.random.uniform(ks[0], (4 * H, D), jnp.float32, -bound, bound)
    w_hh = jax.random.uniform(ks[1], (4 * H, H), jnp.float32, -bound, bound)
    b_ih = jax.random.uniform(ks[2], (4 * H,), jnp.float32, -bound, bound)
    b_hh = jax.random.uniform(ks[3], (4 * H,), jnp.float32, -bound, bound)
    w_fc = jax.random.uniform(ks[4], (1, H), jnp.float32, -bound, bound)
    b_fc = jax.random.uniform(ks[5], (1,), jnp.float32, -bound, bound)
    params = (w_ih, w_hh, b_ih, b_hh, w_fc, b_fc)

    x = jax.random.normal(ks[6], (B, T, D), jnp.float32)

    out = jax.block_until_ready(lstm_forward(x, params))
    ref = jax.block_until_ready(reference_forward(x, params))

    assert out.shape == (B, 1)
    assert jnp.allclose(out, ref, atol=1e-4, rtol=1e-4), (out, ref)
    print("KERNEL_OK")
</pallas_src>

<mosaic_0001>
module attributes {stable_mosaic.version = 11 : i64} {
  func.func @lstm_kernel(%arg0: i32, %arg1: memref<8x8x128xf32, #tpu.memory_space<vmem>>, %arg2: memref<128x512xf32, #tpu.memory_space<vmem>>, %arg3: memref<128x512xf32, #tpu.memory_space<vmem>>, %arg4: memref<1x512xf32, #tpu.memory_space<vmem>>, %arg5: memref<128x128xf32, #tpu.memory_space<vmem>>, %arg6: memref<1x128xf32, #tpu.memory_space<vmem>>, %arg7: memref<8x128xf32, #tpu.memory_space<vmem>>, %arg8: memref<8x8x512xf32, #tpu.memory_space<vmem>>) attributes {dimension_semantics = [#tpu.dimension_semantics<parallel>], iteration_bounds = array<i64: 1>, scalar_prefetch = 0 : i64, scratch_operands = 1 : i64, tpu.core_type = #tpu.core_type<tc>, window_params = [{transform_indices = @transform_0, window_bounds = array<i64: 8, 8, 128>}, {pipeline_mode = #tpu.pipeline_mode<synchronous>, transform_indices = @transform_1, window_bounds = array<i64: 128, 512>}, {pipeline_mode = #tpu.pipeline_mode<synchronous>, transform_indices = @transform_2, window_bounds = array<i64: 128, 512>}, {pipeline_mode = #tpu.pipeline_mode<synchronous>, transform_indices = @transform_3, window_bounds = array<i64: 1, 512>}, {pipeline_mode = #tpu.pipeline_mode<synchronous>, transform_indices = @transform_4, window_bounds = array<i64: 128, 128>}, {pipeline_mode = #tpu.pipeline_mode<synchronous>, transform_indices = @transform_5, window_bounds = array<i64: 1, 128>}, {transform_indices = @transform_6, window_bounds = array<i64: 8, 128>}]} {
    %c0 = arith.constant 0 : index
    %c0_0 = arith.constant 0 : index
    %c0_1 = arith.constant 0 : index
    %0 = vector.load %arg1[%c0, %c0_0, %c0_1] : memref<8x8x128xf32, #tpu.memory_space<vmem>>, vector<8x8x128xf32>
    %1 = vector.shape_cast %0 : vector<8x8x128xf32> to vector<64x128xf32>
    %c0_2 = arith.constant 0 : index
    %c0_3 = arith.constant 0 : index
    %2 = vector.load %arg2[%c0_2, %c0_3] : memref<128x512xf32, #tpu.memory_space<vmem>>, vector<128x512xf32>
    %cst = arith.constant dense<0.000000e+00> : vector<64x512xf32>
    %3 = tpu.matmul %1, %2, %cst {dimension_numbers = #tpu.dot_dimension_numbers<[1], [0], [0], [1], [0, 0, 1, 1], [], []>} : vector<64x128xf32>, vector<128x512xf32>, vector<64x512xf32> -> vector<64x512xf32>
    %c0_4 = arith.constant 0 : index
    %c0_5 = arith.constant 0 : index
    %4 = vector.load %arg4[%c0_4, %c0_5] : memref<1x512xf32, #tpu.memory_space<vmem>>, vector<1x512xf32>
    %5 = vector.broadcast %4 : vector<1x512xf32> to vector<64x512xf32>
    %6 = arith.addf %3, %5 : vector<64x512xf32>
    %7 = vector.shape_cast %6 : vector<64x512xf32> to vector<8x8x512xf32>
    %c0_6 = arith.constant 0 : index
    %c0_7 = arith.constant 0 : index
    %c0_8 = arith.constant 0 : index
    %8 = vector.load %arg8[%c0_6, %c0_7, %c0_8] : memref<8x8x512xf32, #tpu.memory_space<vmem>>, vector<8x8x512xf32>
    tpu.vector_store %arg8[%c0_6, %c0_7, %c0_8], %7 {strides = array<i32>} : memref<8x8x512xf32, #tpu.memory_space<vmem>>, vector<8x8x512xf32>,
    %cst_9 = arith.constant 0.000000e+00 : f32
    %9 = vector.broadcast %cst_9 : f32 to vector<8x128xf32>
    %cst_10 = arith.constant 0.000000e+00 : f32
    %10 = vector.broadcast %cst_10 : f32 to vector<8x128xf32>
    %c0_i32 = arith.constant 0 : i32
    %11 = arith.index_cast %c0_i32 : i32 to index
    %c0_11 = arith.constant 0 : index
    %c0_12 = arith.constant 0 : index
    %12 = vector.load %arg8[%11, %c0_11, %c0_12] : memref<8x8x512xf32, #tpu.memory_space<vmem>>, vector<1x8x512xf32>
    %13 = vector.shape_cast %12 : vector<1x8x512xf32> to vector<8x512xf32>
    %c0_13 = arith.constant 0 : index
    %c0_14 = arith.constant 0 : index
    %14 = vector.load %arg3[%c0_13, %c0_14] : memref<128x512xf32, #tpu.memory_space<vmem>>, vector<128x512xf32>
    %cst_15 = arith.constant dense<0.000000e+00> : vector<8x512xf32>
    %15 = tpu.matmul %9, %14, %cst_15 {dimension_numbers = #tpu.dot_dimension_numbers<[1], [0], [0], [1], [0, 0, 1, 1], [], []>} : vector<8x128xf32>, vector<128x512xf32>, vector<8x512xf32> -> vector<8x512xf32>
    %16 = arith.addf %13, %15 : vector<8x512xf32>
    %17 = vector.extract_strided_slice %16 {offsets = [0, 0], sizes = [8, 128], strides = [1, 1]} : vector<8x512xf32> to vector<8x128xf32>
    %cst_16 = arith.constant 5.000000e-01 : f32
    %18 = vector.broadcast %cst_16 : f32 to vector<8x128xf32>
    %19 = arith.mulf %18, %17 : vector<8x128xf32>
    %20 = math.tanh %19 : vector<8x128xf32>
    %cst_17 = arith.constant 5.000000e-01 : f32
    %21 = vector.broadcast %cst_17 : f32 to vector<8x128xf32>
    %22 = arith.mulf %21, %20 : vector<8x128xf32>
    %cst_18 = arith.constant 5.000000e-01 : f32
    %23 = vector.broadcast %cst_18 : f32 to vector<8x128xf32>
    %24 = arith.addf %22, %23 : vector<8x128xf32>
    %25 = vector.extract_strided_slice %16 {offsets = [0, 128], sizes = [8, 128], strides = [1, 1]} : vector<8x512xf32> to vector<8x128xf32>
    %cst_19 = arith.constant 5.000000e-01 : f32
    %26 = vector.broadcast %cst_19 : f32 to vector<8x128xf32>
    %27 = arith.mulf %26, %25 : vector<8x128xf32>
    %28 = math.tanh %27 : vector<8x128xf32>
    %cst_20 = arith.constant 5.000000e-01 : f32
    %29 = vector.broadcast %cst_20 : f32 to vector<8x128xf32>
    %30 = arith.mulf %29, %28 : vector<8x128xf32>
    %cst_21 = arith.constant 5.000000e-01 : f32
    %31 = vector.broadcast %cst_21 : f32 to vector<8x128xf32>
    %32 = arith.addf %30, %31 : vector<8x128xf32>
    %33 = vector.extract_strided_slice %16 {offsets = [0, 256], sizes = [8, 128], strides = [1, 1]} : vector<8x512xf32> to vector<8x128xf32>
    %34 = math.tanh %33 : vector<8x128xf32>
    %35 = vector.extract_strided_slice %16 {offsets = [0, 384], sizes = [8, 128], strides = [1, 1]} : vector<8x512xf32> to vector<8x128xf32>
    %cst_22 = arith.constant 5.000000e-01 : f32
    %36 = vector.broadcast %cst_22 : f32 to vector<8x128xf32>
    %37 = arith.mulf %36, %35 : vector<8x128xf32>
    %38 = math.tanh %37 : vector<8x128xf32>
    %cst_23 = arith.constant 5.000000e-01 : f32
    %39 = vector.broadcast %cst_23 : f32 to vector<8x128xf32>
    %40 = arith.mulf %39, %38 : vector<8x128xf32>
    %cst_24 = arith.constant 5.000000e-01 : f32
    %41 = vector.broadcast %cst_24 : f32 to vector<8x128xf32>
    %42 = arith.addf %40, %41 : vector<8x128xf32>
    %43 = arith.mulf %32, %10 : vector<8x128xf32>
    %44 = arith.mulf %24, %34 : vector<8x128xf32>
    %45 = arith.addf %43, %44 : vector<8x128xf32>
    %46 = math.tanh %45 : vector<8x128xf32>
    %47 = arith.mulf %42, %46 : vector<8x128xf32>
    %c1_i32 = arith.constant 1 : i32
    %48 = arith.index_cast %c1_i32 : i32 to index
    %c0_25 = arith.constant 0 : index
    %c0_26 = arith.constant 0 : index
    %49 = vector.load %arg8[%48, %c0_25, %c0_26] : memref<8x8x512xf32, #tpu.memory_space<vmem>>, vector<1x8x512xf32>
    %50 = vector.shape_cast %49 : vector<1x8x512xf32> to vector<8x512xf32>
    %c0_27 = arith.constant 0 : index
    %c0_28 = arith.constant 0 : index
    %51 = vector.load %arg3[%c0_27, %c0_28] : memref<128x512xf32, #tpu.memory_space<vmem>>, vector<128x512xf32>
    %cst_29 = arith.constant dense<0.000000e+00> : vector<8x512xf32>
    %52 = tpu.matmul %47, %51, %cst_29 {dimension_numbers = #tpu.dot_dimension_numbers<[1], [0], [0], [1], [0, 0, 1, 1], [], []>} : vector<8x128xf32>, vector<128x512xf32>, vector<8x512xf32> -> vector<8x512xf32>
    %53 = arith.addf %50, %52 : vector<8x512xf32>
    %54 = vector.extract_strided_slice %53 {offsets = [0, 0], sizes = [8, 128], strides = [1, 1]} : vector<8x512xf32> to vector<8x128xf32>
    %cst_30 = arith.constant 5.000000e-01 : f32
    %55 = vector.broadcast %cst_30 : f32 to vector<8x128xf32>
    %56 = arith.mulf %55, %54 : vector<8x128xf32>
    %57 = math.tanh %56 : vector<8x128xf32>
    %cst_31 = arith.constant 5.000000e-01 : f32
    %58 = vector.broadcast %cst_31 : f32 to vector<8x128xf32>
    %59 = arith.mulf %58, %57 : vector<8x128xf32>
    %cst_32 = arith.constant 5.000000e-01 : f32
    %60 = vector.broadcast %cst_32 : f32 to vector<8x128xf32>
    %61 = arith.addf %59, %60 : vector<8x128xf32>
    %62 = vector.extract_strided_slice %53 {offsets = [0, 128], sizes = [8, 128], strides = [1, 1]} : vector<8x512xf32> to vector<8x128xf32>
    %cst_33 = arith.constant 5.000000e-01 : f32
    %63 = vector.broadcast %cst_33 : f32 to vector<8x128xf32>
    %64 = arith.mulf %63, %62 : vector<8x128xf32>
    %65 = math.tanh %64 : vector<8x128xf32>
    %cst_34 = arith.constant 5.000000e-01 : f32
    %66 = vector.broadcast %cst_34 : f32 to vector<8x128xf32>
    %67 = arith.mulf %66, %65 : vector<8x128xf32>
    %cst_35 = arith.constant 5.000000e-01 : f32
    %68 = vector.broadcast %cst_35 : f32 to vector<8x128xf32>
    %69 = arith.addf %67, %68 : vector<8x128xf32>
    %70 = vector.extract_strided_slice %53 {offsets = [0, 256], sizes = [8, 128], strides = [1, 1]} : vector<8x512xf32> to vector<8x128xf32>
    %71 = math.tanh %70 : vector<8x128xf32>
    %72 = vector.extract_strided_slice %53 {offsets = [0, 384], sizes = [8, 128], strides = [1, 1]} : vector<8x512xf32> to vector<8x128xf32>
    %cst_36 = arith.constant 5.000000e-01 : f32
    %73 = vector.broadcast %cst_36 : f32 to vector<8x128xf32>
    %74 = arith.mulf %73, %72 : vector<8x128xf32>
    %75 = math.tanh %74 : vector<8x128xf32>
    %cst_37 = arith.constant 5.000000e-01 : f32
    %76 = vector.broadcast %cst_37 : f32 to vector<8x128xf32>
    %77 = arith.mulf %76, %75 : vector<8x128xf32>
    %cst_38 = arith.constant 5.000000e-01 : f32
    %78 = vector.broadcast %cst_38 : f32 to vector<8x128xf32>
    %79 = arith.addf %77, %78 : vector<8x128xf32>
    %80 = arith.mulf %69, %45 : vector<8x128xf32>
    %81 = arith.mulf %61, %71 : vector<8x128xf32>
    %82 = arith.addf %80, %81 : vector<8x128xf32>
    %83 = math.tanh %82 : vector<8x128xf32>
    %84 = arith.mulf %79, %83 : vector<8x128xf32>
    %c2_i32 = arith.constant 2 : i32
    %85 = arith.index_cast %c2_i32 : i32 to index
    %c0_39 = arith.constant 0 : index
    %c0_40 = arith.constant 0 : index
    %86 = vector.load %arg8[%85, %c0_39, %c0_40] : memref<8x8x512xf32, #tpu.memory_space<vmem>>, vector<1x8x512xf32>
    %87 = vector.shape_cast %86 : vector<1x8x512xf32> to vector<8x512xf32>
    %c0_41 = arith.constant 0 : index
    %c0_42 = arith.constant 0 : index
    %88 = vector.load %arg3[%c0_41, %c0_42] : memref<128x512xf32, #tpu.memory_space<vmem>>, vector<128x512xf32>
    %cst_43 = arith.constant dense<0.000000e+00> : vector<8x512xf32>
    %89 = tpu.matmul %84, %88, %cst_43 {dimension_numbers = #tpu.dot_dimension_numbers<[1], [0], [0], [1], [0, 0, 1, 1], [], []>} : vector<8x128xf32>, vector<128x512xf32>, vector<8x512xf32> -> vector<8x512xf32>
    %90 = arith.addf %87, %89 : vector<8x512xf32>
    %91 = vector.extract_strided_slice %90 {offsets = [0, 0], sizes = [8, 128], strides = [1, 1]} : vector<8x512xf32> to vector<8x128xf32>
    %cst_44 = arith.constant 5.000000e-01 : f32
    %92 = vector.broadcast %cst_44 : f32 to vector<8x128xf32>
    %93 = arith.mulf %92, %91 : vector<8x128xf32>
    %94 = math.tanh %93 : vector<8x128xf32>
    %cst_45 = arith.constant 5.000000e-01 : f32
    %95 = vector.broadcast %cst_45 : f32 to vector<8x128xf32>
    %96 = arith.mulf %95, %94 : vector<8x128xf32>
    %cst_46 = arith.constant 5.000000e-01 : f32
    %97 = vector.broadcast %cst_46 : f32 to vector<8x128xf32>
    %98 = arith.addf %96, %97 : vector<8x128xf32>
    %99 = vector.extract_strided_slice %90 {offsets = [0, 128], sizes = [8, 128], strides = [1, 1]} : vector<8x512xf32> to vector<8x128xf32>
    %cst_47 = arith.constant 5.000000e-01 : f32
    %100 = vector.broadcast %cst_47 : f32 to vector<8x128xf32>
    %101 = arith.mulf %100, %99 : vector<8x128xf32>
    %102 = math.tanh %101 : vector<8x128xf32>
    %cst_48 = arith.constant 5.000000e-01 : f32
    %103 = vector.broadcast %cst_48 : f32 to vector<8x128xf32>
    %104 = arith.mulf %103, %102 : vector<8x128xf32>
    %cst_49 = arith.constant 5.000000e-01 : f32
    %105 = vector.broadcast %cst_49 : f32 to vector<8x128xf32>
    %106 = arith.addf %104, %105 : vector<8x128xf32>
    %107 = vector.extract_strided_slice %90 {offsets = [0, 256], sizes = [8, 128], strides = [1, 1]} : vector<8x512xf32> to vector<8x128xf32>
    %108 = math.tanh %107 : vector<8x128xf32>
    %109 = vector.extract_strided_slice %90 {offsets = [0, 384], sizes = [8, 128], strides = [1, 1]} : vector<8x512xf32> to vector<8x128xf32>
    %cst_50 = arith.constant 5.000000e-01 : f32
    %110 = vector.broadcast %cst_50 : f32 to vector<8x128xf32>
    %111 = arith.mulf %110, %109 : vector<8x128xf32>
    %112 = math.tanh %111 : vector<8x128xf32>
    %cst_51 = arith.constant 5.000000e-01 : f32
    %113 = vector.broadcast %cst_51 : f32 to vector<8x128xf32>
    %114 = arith.mulf %113, %112 : vector<8x128xf32>
    %cst_52 = arith.constant 5.000000e-01 : f32
    %115 = vector.broadcast %cst_52 : f32 to vector<8x128xf32>
    %116 = arith.addf %114, %115 : vector<8x128xf32>
    %117 = arith.mulf %106, %82 : vector<8x128xf32>
    %118 = arith.mulf %98, %108 : vector<8x128xf32>
    %119 = arith.addf %117, %118 : vector<8x128xf32>
    %120 = math.tanh %119 : vector<8x128xf32>
    %121 = arith.mulf %116, %120 : vector<8x128xf32>
    %c3_i32 = arith.constant 3 : i32
    %122 = arith.index_cast %c3_i32 : i32 to index
    %c0_53 = arith.constant 0 : index
    %c0_54 = arith.constant 0 : index
    %123 = vector.load %arg8[%122, %c0_53, %c0_54] : memref<8x8x512xf32, #tpu.memory_space<vmem>>, vector<1x8x512xf32>
    %124 = vector.shape_cast %123 : vector<1x8x512xf32> to vector<8x512xf32>
    %c0_55 = arith.constant 0 : index
    %c0_56 = arith.constant 0 : index
    %125 = vector.load %arg3[%c0_55, %c0_56] : memref<128x512xf32, #tpu.memory_space<vmem>>, vector<128x512xf32>
    %cst_57 = arith.constant dense<0.000000e+00> : vector<8x512xf32>
    %126 = tpu.matmul %121, %125, %cst_57 {dimension_numbers = #tpu.dot_dimension_numbers<[1], [0], [0], [1], [0, 0, 1, 1], [], []>} : vector<8x128xf32>, vector<128x512xf32>, vector<8x512xf32> -> vector<8x512xf32>
    %127 = arith.addf %124, %126 : vector<8x512xf32>
    %128 = vector.extract_strided_slice %127 {offsets = [0, 0], sizes = [8, 128], strides = [1, 1]} : vector<8x512xf32> to vector<8x128xf32>
    %cst_58 = arith.constant 5.000000e-01 : f32
    %129 = vector.broadcast %cst_58 : f32 to vector<8x128xf32>
    %130 = arith.mulf %129, %128 : vector<8x128xf32>
    %131 = math.tanh %130 : vector<8x128xf32>
    %cst_59 = arith.constant 5.000000e-01 : f32
    %132 = vector.broadcast %cst_59 : f32 to vector<8x128xf32>
    %133 = arith.mulf %132, %131 : vector<8x128xf32>
    %cst_60 = arith.constant 5.000000e-01 : f32
    %134 = vector.broadcast %cst_60 : f32 to vector<8x128xf32>
    %135 = arith.addf %133, %134 : vector<8x128xf32>
    %136 = vector.extract_strided_slice %127 {offsets = [0, 128], sizes = [8, 128], strides = [1, 1]} : vector<8x512xf32> to vector<8x128xf32>
    %cst_61 = arith.constant 5.000000e-01 : f32
    %137 = vector.broadcast %cst_61 : f32 to vector<8x128xf32>
    %138 = arith.mulf %137, %136 : vector<8x128xf32>
    %139 = math.tanh %138 : vector<8x128xf32>
    %cst_62 = arith.constant 5.000000e-01 : f32
    %140 = vector.broadcast %cst_62 : f32 to vector<8x128xf32>
    %141 = arith.mulf %140, %139 : vector<8x128xf32>
    %cst_63 = arith.constant 5.000000e-01 : f32
    %142 = vector.broadcast %cst_63 : f32 to vector<8x128xf32>
    %143 = arith.addf %141, %142 : vector<8x128xf32>
    %144 = vector.extract_strided_slice %127 {offsets = [0, 256], sizes = [8, 128], strides = [1, 1]} : vector<8x512xf32> to vector<8x128xf32>
    %145 = math.tanh %144 : vector<8x128xf32>
    %146 = vector.extract_strided_slice %127 {offsets = [0, 384], sizes = [8, 128], strides = [1, 1]} : vector<8x512xf32> to vector<8x128xf32>
    %cst_64 = arith.constant 5.000000e-01 : f32
    %147 = vector.broadcast %cst_64 : f32 to vector<8x128xf32>
    %148 = arith.mulf %147, %146 : vector<8x128xf32>
    %149 = math.tanh %148 : vector<8x128xf32>
    %cst_65 = arith.constant 5.000000e-01 : f32
    %150 = vector.broadcast %cst_65 : f32 to vector<8x128xf32>
    %151 = arith.mulf %150, %149 : vector<8x128xf32>
    %cst_66 = arith.constant 5.000000e-01 : f32
    %152 = vector.broadcast %cst_66 : f32 to vector<8x128xf32>
    %153 = arith.addf %151, %152 : vector<8x128xf32>
    %154 = arith.mulf %143, %119 : vector<8x128xf32>
    %155 = arith.mulf %135, %145 : vector<8x128xf32>
    %156 = arith.addf %154, %155 : vector<8x128xf32>
    %157 = math.tanh %156 : vector<8x128xf32>
    %158 = arith.mulf %153, %157 : vector<8x128xf32>
    %c4_i32 = arith.constant 4 : i32
    %159 = arith.index_cast %c4_i32 : i32 to index
    %c0_67 = arith.constant 0 : index
    %c0_68 = arith.constant 0 : index
    %160 = vector.load %arg8[%159, %c0_67, %c0_68] : memref<8x8x512xf32, #tpu.memory_space<vmem>>, vector<1x8x512xf32>
    %161 = vector.shape_cast %160 : vector<1x8x512xf32> to vector<8x512xf32>
    %c0_69 = arith.constant 0 : index
    %c0_70 = arith.constant 0 : index
    %162 = vector.load %arg3[%c0_69, %c0_70] : memref<128x512xf32, #tpu.memory_space<vmem>>, vector<128x512xf32>
    %cst_71 = arith.constant dense<0.000000e+00> : vector<8x512xf32>
    %163 = tpu.matmul %158, %162, %cst_71 {dimension_numbers = #tpu.dot_dimension_numbers<[1], [0], [0], [1], [0, 0, 1, 1], [], []>} : vector<8x128xf32>, vector<128x512xf32>, vector<8x512xf32> -> vector<8x512xf32>
    %164 = arith.addf %161, %163 : vector<8x512xf32>
    %165 = vector.extract_strided_slice %164 {offsets = [0, 0], sizes = [8, 128], strides = [1, 1]} : vector<8x512xf32> to vector<8x128xf32>
    %cst_72 = arith.constant 5.000000e-01 : f32
    %166 = vector.broadcast %cst_72 : f32 to vector<8x128xf32>
    %167 = arith.mulf %166, %165 : vector<8x128xf32>
    %168 = math.tanh %167 : vector<8x128xf32>
    %cst_73 = arith.constant 5.000000e-01 : f32
    %169 = vector.broadcast %cst_73 : f32 to vector<8x128xf32>
    %170 = arith.mulf %169, %168 : vector<8x128xf32>
    %cst_74 = arith.constant 5.000000e-01 : f32
    %171 = vector.broadcast %cst_74 : f32 to vector<8x128xf32>
    %172 = arith.addf %170, %171 : vector<8x128xf32>
    %173 = vector.extract_strided_slice %164 {offsets = [0, 128], sizes = [8, 128], strides = [1, 1]} : vector<8x512xf32> to vector<8x128xf32>
    %cst_75 = arith.constant 5.000000e-01 : f32
    %174 = vector.broadcast %cst_75 : f32 to vector<8x128xf32>
    %175 = arith.mulf %174, %173 : vector<8x128xf32>
    %176 = math.tanh %175 : vector<8x128xf32>
    %cst_76 = arith.constant 5.000000e-01 : f32
    %177 = vector.broadcast %cst_76 : f32 to vector<8x128xf32>
    %178 = arith.mulf %177, %176 : vector<8x128xf32>
    %cst_77 = arith.constant 5.000000e-01 : f32
    %179 = vector.broadcast %cst_77 : f32 to vector<8x128xf32>
    %180 = arith.addf %178, %179 : vector<8x128xf32>
    %181 = vector.extract_strided_slice %164 {offsets = [0, 256], sizes = [8, 128], strides = [1, 1]} : vector<8x512xf32> to vector<8x128xf32>
    %182 = math.tanh %181 : vector<8x128xf32>
    %183 = vector.extract_strided_slice %164 {offsets = [0, 384], sizes = [8, 128], strides = [1, 1]} : vector<8x512xf32> to vector<8x128xf32>
    %cst_78 = arith.constant 5.000000e-01 : f32
    %184 = vector.broadcast %cst_78 : f32 to vector<8x128xf32>
    %185 = arith.mulf %184, %183 : vector<8x128xf32>
    %186 = math.tanh %185 : vector<8x128xf32>
    %cst_79 = arith.constant 5.000000e-01 : f32
    %187 = vector.broadcast %cst_79 : f32 to vector<8x128xf32>
    %188 = arith.mulf %187, %186 : vector<8x128xf32>
    %cst_80 = arith.constant 5.000000e-01 : f32
    %189 = vector.broadcast %cst_80 : f32 to vector<8x128xf32>
    %190 = arith.addf %188, %189 : vector<8x128xf32>
    %191 = arith.mulf %180, %156 : vector<8x128xf32>
    %192 = arith.mulf %172, %182 : vector<8x128xf32>
    %193 = arith.addf %191, %192 : vector<8x128xf32>
    %194 = math.tanh %193 : vector<8x128xf32>
    %195 = arith.mulf %190, %194 : vector<8x128xf32>
    %c5_i32 = arith.constant 5 : i32
    %196 = arith.index_cast %c5_i32 : i32 to index
    %c0_81 = arith.constant 0 : index
    %c0_82 = arith.constant 0 : index
    %197 = vector.load %arg8[%196, %c0_81, %c0_82] : memref<8x8x512xf32, #tpu.memory_space<vmem>>, vector<1x8x512xf32>
    %198 = vector.shape_cast %197 : vector<1x8x512xf32> to vector<8x512xf32>
    %c0_83 = arith.constant 0 : index
    %c0_84 = arith.constant 0 : index
    %199 = vector.load %arg3[%c0_83, %c0_84] : memref<128x512xf32, #tpu.memory_space<vmem>>, vector<128x512xf32>
    %cst_85 = arith.constant dense<0.000000e+00> : vector<8x512xf32>
    %200 = tpu.matmul %195, %199, %cst_85 {dimension_numbers = #tpu.dot_dimension_numbers<[1], [0], [0], [1], [0, 0, 1, 1], [], []>} : vector<8x128xf32>, vector<128x512xf32>, vector<8x512xf32> -> vector<8x512xf32>
    %201 = arith.addf %198, %200 : vector<8x512xf32>
    %202 = vector.extract_strided_slice %201 {offsets = [0, 0], sizes = [8, 128], strides = [1, 1]} : vector<8x512xf32> to vector<8x128xf32>
    %cst_86 = arith.constant 5.000000e-01 : f32
    %203 = vector.broadcast %cst_86 : f32 to vector<8x128xf32>
    %204 = arith.mulf %203, %202 : vector<8x128xf32>
    %205 = math.tanh %204 : vector<8x128xf32>
    %cst_87 = arith.constant 5.000000e-01 : f32
    %206 = vector.broadcast %cst_87 : f32 to vector<8x128xf32>
    %207 = arith.mulf %206, %205 : vector<8x128xf32>
    %cst_88 = arith.constant 5.000000e-01 : f32
    %208 = vector.broadcast %cst_88 : f32 to vector<8x128xf32>
    %209 = arith.addf %207, %208 : vector<8x128xf32>
    %210 = vector.extract_strided_slice %201 {offsets = [0, 128], sizes = [8, 128], strides = [1, 1]} : vector<8x512xf32> to vector<8x128xf32>
    %cst_89 = arith.constant 5.000000e-01 : f32
    %211 = vector.broadcast %cst_89 : f32 to vector<8x128xf32>
    %212 = arith.mulf %211, %210 : vector<8x128xf32>
    %213 = math.tanh %212 : vector<8x128xf32>
    %cst_90 = arith.constant 5.000000e-01 : f32
    %214 = vector.broadcast %cst_90 : f32 to vector<8x128xf32>
    %215 = arith.mulf %214, %213 : vector<8x128xf32>
    %cst_91 = arith.constant 5.000000e-01 : f32
    %216 = vector.broadcast %cst_91 : f32 to vector<8x128xf32>
    %217 = arith.addf %215, %216 : vector<8x128xf32>
    %218 = vector.extract_strided_slice %201 {offsets = [0, 256], sizes = [8, 128], strides = [1, 1]} : vector<8x512xf32> to vector<8x128xf32>
    %219 = math.tanh %218 : vector<8x128xf32>
    %220 = vector.extract_strided_slice %201 {offsets = [0, 384], sizes = [8, 128], strides = [1, 1]} : vector<8x512xf32> to vector<8x128xf32>
    %cst_92 = arith.constant 5.000000e-01 : f32
    %221 = vector.broadcast %cst_92 : f32 to vector<8x128xf32>
    %222 = arith.mulf %221, %220 : vector<8x128xf32>
    %223 = math.tanh %222 : vector<8x128xf32>
    %cst_93 = arith.constant 5.000000e-01 : f32
    %224 = vector.broadcast %cst_93 : f32 to vector<8x128xf32>
    %225 = arith.mulf %224, %223 : vector<8x128xf32>
    %cst_94 = arith.constant 5.000000e-01 : f32
    %226 = vector.broadcast %cst_94 : f32 to vector<8x128xf32>
    %227 = arith.addf %225, %226 : vector<8x128xf32>
    %228 = arith.mulf %217, %193 : vector<8x128xf32>
    %229 = arith.mulf %209, %219 : vector<8x128xf32>
    %230 = arith.addf %228, %229 : vector<8x128xf32>
    %231 = math.tanh %230 : vector<8x128xf32>
    %232 = arith.mulf %227, %231 : vector<8x128xf32>
    %c6_i32 = arith.constant 6 : i32
    %233 = arith.index_cast %c6_i32 : i32 to index
    %c0_95 = arith.constant 0 : index
    %c0_96 = arith.constant 0 : index
    %234 = vector.load %arg8[%233, %c0_95, %c0_96] : memref<8x8x512xf32, #tpu.memory_space<vmem>>, vector<1x8x512xf32>
    %235 = vector.shape_cast %234 : vector<1x8x512xf32> to vector<8x512xf32>
    %c0_97 = arith.constant 0 : index
    %c0_98 = arith.constant 0 : index
    %236 = vector.load %arg3[%c0_97, %c0_98] : memref<128x512xf32, #tpu.memory_space<vmem>>, vector<128x512xf32>
    %cst_99 = arith.constant dense<0.000000e+00> : vector<8x512xf32>
    %237 = tpu.matmul %232, %236, %cst_99 {dimension_numbers = #tpu.dot_dimension_numbers<[1], [0], [0], [1], [0, 0, 1, 1], [], []>} : vector<8x128xf32>, vector<128x512xf32>, vector<8x512xf32> -> vector<8x512xf32>
    %238 = arith.addf %235, %237 : vector<8x512xf32>
    %239 = vector.extract_strided_slice %238 {offsets = [0, 0], sizes = [8, 128], strides = [1, 1]} : vector<8x512xf32> to vector<8x128xf32>
    %cst_100 = arith.constant 5.000000e-01 : f32
    %240 = vector.broadcast %cst_100 : f32 to vector<8x128xf32>
    %241 = arith.mulf %240, %239 : vector<8x128xf32>
    %242 = math.tanh %241 : vector<8x128xf32>
    %cst_101 = arith.constant 5.000000e-01 : f32
    %243 = vector.broadcast %cst_101 : f32 to vector<8x128xf32>
    %244 = arith.mulf %243, %242 : vector<8x128xf32>
    %cst_102 = arith.constant 5.000000e-01 : f32
    %245 = vector.broadcast %cst_102 : f32 to vector<8x128xf32>
    %246 = arith.addf %244, %245 : vector<8x128xf32>
    %247 = vector.extract_strided_slice %238 {offsets = [0, 128], sizes = [8, 128], strides = [1, 1]} : vector<8x512xf32> to vector<8x128xf32>
    %cst_103 = arith.constant 5.000000e-01 : f32
    %248 = vector.broadcast %cst_103 : f32 to vector<8x128xf32>
    %249 = arith.mulf %248, %247 : vector<8x128xf32>
    %250 = math.tanh %249 : vector<8x128xf32>
    %cst_104 = arith.constant 5.000000e-01 : f32
    %251 = vector.broadcast %cst_104 : f32 to vector<8x128xf32>
    %252 = arith.mulf %251, %250 : vector<8x128xf32>
    %cst_105 = arith.constant 5.000000e-01 : f32
    %253 = vector.broadcast %cst_105 : f32 to vector<8x128xf32>
    %254 = arith.addf %252, %253 : vector<8x128xf32>
    %255 = vector.extract_strided_slice %238 {offsets = [0, 256], sizes = [8, 128], strides = [1, 1]} : vector<8x512xf32> to vector<8x128xf32>
    %256 = math.tanh %255 : vector<8x128xf32>
    %257 = vector.extract_strided_slice %238 {offsets = [0, 384], sizes = [8, 128], strides = [1, 1]} : vector<8x512xf32> to vector<8x128xf32>
    %cst_106 = arith.constant 5.000000e-01 : f32
    %258 = vector.broadcast %cst_106 : f32 to vector<8x128xf32>
    %259 = arith.mulf %258, %257 : vector<8x128xf32>
    %260 = math.tanh %259 : vector<8x128xf32>
    %cst_107 = arith.constant 5.000000e-01 : f32
    %261 = vector.broadcast %cst_107 : f32 to vector<8x128xf32>
    %262 = arith.mulf %261, %260 : vector<8x128xf32>
    %cst_108 = arith.constant 5.000000e-01 : f32
    %263 = vector.broadcast %cst_108 : f32 to vector<8x128xf32>
    %264 = arith.addf %262, %263 : vector<8x128xf32>
    %265 = arith.mulf %254, %230 : vector<8x128xf32>
    %266 = arith.mulf %246, %256 : vector<8x128xf32>
    %267 = arith.addf %265, %266 : vector<8x128xf32>
    %268 = math.tanh %267 : vector<8x128xf32>
    %269 = arith.mulf %264, %268 : vector<8x128xf32>
    %c7_i32 = arith.constant 7 : i32
    %270 = arith.index_cast %c7_i32 : i32 to index
    %c0_109 = arith.constant 0 : index
    %c0_110 = arith.constant 0 : index
    %271 = vector.load %arg8[%270, %c0_109, %c0_110] : memref<8x8x512xf32, #tpu.memory_space<vmem>>, vector<1x8x512xf32>
    %272 = vector.shape_cast %271 : vector<1x8x512xf32> to vector<8x512xf32>
    %c0_111 = arith.constant 0 : index
    %c0_112 = arith.constant 0 : index
    %273 = vector.load %arg3[%c0_111, %c0_112] : memref<128x512xf32, #tpu.memory_space<vmem>>, vector<128x512xf32>
    %cst_113 = arith.constant dense<0.000000e+00> : vector<8x512xf32>
    %274 = tpu.matmul %269, %273, %cst_113 {dimension_numbers = #tpu.dot_dimension_numbers<[1], [0], [0], [1], [0, 0, 1, 1], [], []>} : vector<8x128xf32>, vector<128x512xf32>, vector<8x512xf32> -> vector<8x512xf32>
    %275 = arith.addf %272, %274 : vector<8x512xf32>
    %276 = vector.extract_strided_slice %275 {offsets = [0, 0], sizes = [8, 128], strides = [1, 1]} : vector<8x512xf32> to vector<8x128xf32>
    %cst_114 = arith.constant 5.000000e-01 : f32
    %277 = vector.broadcast %cst_114 : f32 to vector<8x128xf32>
    %278 = arith.mulf %277, %276 : vector<8x128xf32>
    %279 = math.tanh %278 : vector<8x128xf32>
    %cst_115 = arith.constant 5.000000e-01 : f32
    %280 = vector.broadcast %cst_115 : f32 to vector<8x128xf32>
    %281 = arith.mulf %280, %279 : vector<8x128xf32>
    %cst_116 = arith.constant 5.000000e-01 : f32
    %282 = vector.broadcast %cst_116 : f32 to vector<8x128xf32>
    %283 = arith.addf %281, %282 : vector<8x128xf32>
    %284 = vector.extract_strided_slice %275 {offsets = [0, 128], sizes = [8, 128], strides = [1, 1]} : vector<8x512xf32> to vector<8x128xf32>
    %cst_117 = arith.constant 5.000000e-01 : f32
    %285 = vector.broadcast %cst_117 : f32 to vector<8x128xf32>
    %286 = arith.mulf %285, %284 : vector<8x128xf32>
    %287 = math.tanh %286 : vector<8x128xf32>
    %cst_118 = arith.constant 5.000000e-01 : f32
    %288 = vector.broadcast %cst_118 : f32 to vector<8x128xf32>
    %289 = arith.mulf %288, %287 : vector<8x128xf32>
    %cst_119 = arith.constant 5.000000e-01 : f32
    %290 = vector.broadcast %cst_119 : f32 to vector<8x128xf32>
    %291 = arith.addf %289, %290 : vector<8x128xf32>
    %292 = vector.extract_strided_slice %275 {offsets = [0, 256], sizes = [8, 128], strides = [1, 1]} : vector<8x512xf32> to vector<8x128xf32>
    %293 = math.tanh %292 : vector<8x128xf32>
    %294 = vector.extract_strided_slice %275 {offsets = [0, 384], sizes = [8, 128], strides = [1, 1]} : vector<8x512xf32> to vector<8x128xf32>
    %cst_120 = arith.constant 5.000000e-01 : f32
    %295 = vector.broadcast %cst_120 : f32 to vector<8x128xf32>
    %296 = arith.mulf %295, %294 : vector<8x128xf32>
    %297 = math.tanh %296 : vector<8x128xf32>
    %cst_121 = arith.constant 5.000000e-01 : f32
    %298 = vector.broadcast %cst_121 : f32 to vector<8x128xf32>
    %299 = arith.mulf %298, %297 : vector<8x128xf32>
    %cst_122 = arith.constant 5.000000e-01 : f32
    %300 = vector.broadcast %cst_122 : f32 to vector<8x128xf32>
    %301 = arith.addf %299, %300 : vector<8x128xf32>
    %302 = arith.mulf %291, %267 : vector<8x128xf32>
    %303 = arith.mulf %283, %293 : vector<8x128xf32>
    %304 = arith.addf %302, %303 : vector<8x128xf32>
    %305 = math.tanh %304 : vector<8x128xf32>
    %306 = arith.mulf %301, %305 : vector<8x128xf32>
    %c8_i32 = arith.constant 8 : i32
    %c0_123 = arith.constant 0 : index
    %c0_124 = arith.constant 0 : index
    %307 = vector.load %arg5[%c0_123, %c0_124] : memref<128x128xf32, #tpu.memory_space<vmem>>, vector<128x128xf32>
    %cst_125 = arith.constant dense<0.000000e+00> : vector<8x128xf32>
    %308 = tpu.matmul %306, %307, %cst_125 {dimension_numbers = #tpu.dot_dimension_numbers<[1], [0], [0], [1], [0, 0, 1, 1], [], []>} : vector<8x128xf32>, vector<128x128xf32>, vector<8x128xf32> -> vector<8x128xf32>
    %c0_126 = arith.constant 0 : index
    %c0_127 = arith.constant 0 : index
    %309 = vector.load %arg6[%c0_126, %c0_127] : memref<1x128xf32, #tpu.memory_space<vmem>>, vector<1x128xf32>
    %310 = vector.broadcast %309 : vector<1x128xf32> to vector<8x128xf32>
    %311 = arith.addf %308, %310 : vector<8x128xf32>
    %c0_128 = arith.constant 0 : index
    %c0_129 = arith.constant 0 : index
    %312 = vector.load %arg7[%c0_128, %c0_129] : memref<8x128xf32, #tpu.memory_space<vmem>>, vector<8x128xf32>
    tpu.vector_store %arg7[%c0_128, %c0_129], %311 {strides = array<i32>} : memref<8x128xf32, #tpu.memory_space<vmem>>, vector<8x128xf32>,
    return
  }
  func.func @transform_0(%arg0: i32) -> (i32, i32, i32) {
    %c0_i32 = arith.constant 0 : i32
    %c0_i32_0 = arith.constant 0 : i32
    %c0_i32_1 = arith.constant 0 : i32
    return %c0_i32, %arg0, %c0_i32_0 : i32, i32, i32
  }
  func.func @transform_1(%arg0: i32) -> (i32, i32) {
    %c0_i32 = arith.constant 0 : i32
    %c0_i32_0 = arith.constant 0 : i32
    %c0_i32_1 = arith.constant 0 : i32
    return %c0_i32, %c0_i32_0 : i32, i32
  }
  func.func @transform_2(%arg0: i32) -> (i32, i32) {
    %c0_i32 = arith.constant 0 : i32
    %c0_i32_0 = arith.constant 0 : i32
    %c0_i32_1 = arith.constant 0 : i32
    return %c0_i32, %c0_i32_0 : i32, i32
  }
  func.func @transform_3(%arg0: i32) -> (i32, i32) {
    %c0_i32 = arith.constant 0 : i32
    %c0_i32_0 = arith.constant 0 : i32
    %c0_i32_1 = arith.constant 0 : i32
    return %c0_i32, %c0_i32_0 : i32, i32
  }
  func.func @transform_4(%arg0: i32) -> (i32, i32) {
    %c0_i32 = arith.constant 0 : i32
    %c0_i32_0 = arith.constant 0 : i32
    %c0_i32_1 = arith.constant 0 : i32
    return %c0_i32, %c0_i32_0 : i32, i32
  }
  func.func @transform_5(%arg0: i32) -> (i32, i32) {
    %c0_i32 = arith.constant 0 : i32
    %c0_i32_0 = arith.constant 0 : i32
    %c0_i32_1 = arith.constant 0 : i32
    return %c0_i32, %c0_i32_0 : i32, i32
  }
  func.func @transform_6(%arg0: i32) -> (i32, i32) {
    %c0_i32 = arith.constant 0 : i32
    %c0_i32_0 = arith.constant 0 : i32
    return %arg0, %c0_i32 : i32, i32
  }
}

</mosaic_0001>

<llo_original>
// kernel: tpu_custom_call.1
$region0: #{tpu_custom_call.1}
  #allocation0 [shape = 'u32[]', space=smem, size = 0x4, offset = 0x4, fixed_abs, tag = 'smem constant byte address 0x4 - core index']
  #allocation1 [shape = 'u32[144,128]{1,0:T(1,128)}', space=vmem, size = 0x12000, scoped, tag = 'internal scratch']
  #allocation2 [shape = 'f32[8,8,512]{2,1,0:T(8,128)}', space=vmem, size = 0x20000, scoped, tag = 'scratch operand']
  %s0 = inlined_call_operand.hbm [shape: f32[8,8,128], index: 0, kind: input, shape index: {}]
  %s1 = inlined_call_operand.hbm [shape: f32[128,512], index: 1, kind: input, shape index: {}]
  %s2 = inlined_call_operand.hbm [shape: f32[128,512], index: 2, kind: input, shape index: {}]
  %s3 = inlined_call_operand.vmem [shape: f32[1,512], index: 3, kind: input, shape index: {}]
  %s4 = inlined_call_operand.hbm [shape: f32[128,128], index: 4, kind: input, shape index: {}]
  %s5 = inlined_call_operand.vmem [shape: f32[1,128], index: 5, kind: input, shape index: {}]
  %s6 = inlined_call_operand.hbm [shape: f32[8,128], index: 6, kind: output, shape index: {}]
  %s7 = sld [smem:[#allocation0]]
  $region50: #{tpu_custom_call.1} parent=0
    _
  %s9 = ssub.s32 1, %s7
  %s10 = scalar_select 0, %s9, %s7
  $region1: #{tpu_custom_call.1} parent=0
    #allocation3 [shape = 'u8[32768]{0}', space=vmem, size = 0x8000, scoped, tag = 'input window, operand 0, single buffered']
    #allocation4 [shape = 's32[1]{0}', space=sflag, size = 0x4, scoped, tag = 'scoped memory for tpu_custom_call.1']
    #allocation5 [shape = 's32[1]{0}', space=sflag, size = 0x4, scoped, tag = 'scoped memory for tpu_custom_call.1']
    #allocation6 [shape = 'u8[262144]{0}', space=vmem, size = 0x40000, scoped, tag = 'input window, operand 1, single buffered']
    #allocation7 [shape = 's32[1]{0}', space=sflag, size = 0x4, scoped, tag = 'scoped memory for tpu_custom_call.1']
    #allocation8 [shape = 'u8[262144]{0}', space=vmem, size = 0x40000, scoped, tag = 'input window, operand 2, single buffered']
    #allocation9 [shape = 'u8[65536]{0}', space=vmem, size = 0x10000, scoped, tag = 'input window, operand 4, single buffered']
    #allocation10 [shape = 's32[1]{0}', space=sflag, size = 0x4, scoped, tag = 'scoped memory for tpu_custom_call.1']
    #allocation11 [shape = 'u8[4096]{0}', space=vmem, size = 0x1000, scoped, tag = 'output window, operand 0, single buffered']
    %11 = vsyncpa [#allocation4], 0
    %12 = vsyncpa [#allocation7], 0
    %13 = vsyncpa [#allocation10], 0
    %14 = vsyncpa [#allocation5], 0
    // Predicated region
    $region2: #{tpu_custom_call.1} parent=1 // pred_check
      _
    $region3: #{tpu_custom_call.1} parent=1 // pred_check_branch
      %16 = sbr.rel (0) target = $region5
    $region4: #{tpu_custom_call.1} parent=1 // pred_region
      %s18 = ssub.s32 1024, 1024
      %19 = vsyncadd [#allocation4], %s18
      %s20 = sshll.u32 [#allocation3], 4
      %s21 = int_to_ptr.vmem [resolvable:$true] %s20
      %26 = dma.hbm_to_vmem [thread:$0]  %s0, 1024, %s21, [#allocation4], 128, 128, 8
    $region5: #{tpu_custom_call.1} parent=1 // pred_fallthru
      _
    // Predicated region
    $region6: #{tpu_custom_call.1} parent=1 // pred_check
      _
    $region7: #{tpu_custom_call.1} parent=1 // pred_check_branch
      %28 = sbr.rel (0) target = $region9
    $region8: #{tpu_custom_call.1} parent=1 // pred_region
      %s30 = ssub.s32 8192, 8192
      %31 = vsyncadd [#allocation7], %s30
      %s32 = sshll.u32 [#allocation6], 4
      %s33 = int_to_ptr.vmem [resolvable:$true] %s32
      %38 = dma.hbm_to_vmem [thread:$0]  %s1, 8192, %s33, [#allocation7], 512, 512, 32
    $region9: #{tpu_custom_call.1} parent=1 // pred_fallthru
      _
    // Predicated region
    $region10: #{tpu_custom_call.1} parent=1 // pred_check
      _
    $region11: #{tpu_custom_call.1} parent=1 // pred_check_branch
      %40 = sbr.rel (0) target = $region13
    $region12: #{tpu_custom_call.1} parent=1 // pred_region
      %s42 = ssub.s32 8192, 8192
      %43 = vsyncadd [#allocation7], %s42
      %s44 = sshll.u32 [#allocation8], 4
      %s45 = int_to_ptr.vmem [resolvable:$true] %s44
      %50 = dma.hbm_to_vmem [thread:$0]  %s2, 8192, %s45, [#allocation7], 512, 512, 32
    $region13: #{tpu_custom_call.1} parent=1 // pred_fallthru
      _
    // Predicated region
    $region14: #{tpu_custom_call.1} parent=1 // pred_check
      _
    $region15: #{tpu_custom_call.1} parent=1 // pred_check_branch
      %52 = sbr.rel (0) target = $region17
    $region16: #{tpu_custom_call.1} parent=1 // pred_region
      _
    $region17: #{tpu_custom_call.1} parent=1 // pred_fallthru
      _
    // Predicated region
    $region18: #{tpu_custom_call.1} parent=1 // pred_check
      _
    $region19: #{tpu_custom_call.1} parent=1 // pred_check_branch
      %54 = sbr.rel (0) target = $region21
    $region20: #{tpu_custom_call.1} parent=1 // pred_region
      %s56 = ssub.s32 2048, 2048
      %57 = vsyncadd [#allocation10], %s56
      %s58 = sshll.u32 [#allocation9], 4
      %s59 = int_to_ptr.vmem [resolvable:$true] %s58
      %64 = dma.hbm_to_vmem [thread:$0]  %s4, 2048, %s59, [#allocation10], 128, 128, 8
    $region21: #{tpu_custom_call.1} parent=1 // pred_fallthru
      _
    // Predicated region
    $region22: #{tpu_custom_call.1} parent=1 // pred_check
      _
    $region23: #{tpu_custom_call.1} parent=1 // pred_check_branch
      %66 = sbr.rel (0) target = $region25
    $region24: #{tpu_custom_call.1} parent=1 // pred_region
      _
    $region25: #{tpu_custom_call.1} parent=1 // pred_fallthru
      _
    // Predicated region
    $region26: #{tpu_custom_call.1} parent=1 // pred_check
      _
    $region27: #{tpu_custom_call.1} parent=1 // pred_check_branch
      %68 = sbr.rel (0) target = $region29
    $region28: #{tpu_custom_call.1} parent=1 // pred_region
      %69 = dma.done [#allocation4], 1024
    $region29: #{tpu_custom_call.1} parent=1 // pred_fallthru
      _
    // Predicated region
    $region30: #{tpu_custom_call.1} parent=1 // pred_check
      _
    $region31: #{tpu_custom_call.1} parent=1 // pred_check_branch
      %71 = sbr.rel (0) target = $region33
    $region32: #{tpu_custom_call.1} parent=1 // pred_region
      %72 = dma.done [#allocation7], 8192
    $region33: #{tpu_custom_call.1} parent=1 // pred_fallthru
      _
    // Predicated region
    $region34: #{tpu_custom_call.1} parent=1 // pred_check
      _
    $region35: #{tpu_custom_call.1} parent=1 // pred_check_branch
      %74 = sbr.rel (0) target = $region37
    $region36: #{tpu_custom_call.1} parent=1 // pred_region
      %75 = dma.done [#allocation7], 8192
    $region37: #{tpu_custom_call.1} parent=1 // pred_fallthru
      _
    // Predicated region
    $region38: #{tpu_custom_call.1} parent=1 // pred_check
      _
    $region39: #{tpu_custom_call.1} parent=1 // pred_check_branch
      %77 = sbr.rel (0) target = $region41
    $region40: #{tpu_custom_call.1} parent=1 // pred_region
      %78 = dma.done [#allocation10], 2048
    $region41: #{tpu_custom_call.1} parent=1 // pred_fallthru
      _
    %v79 = vld [vmem:[#allocation3] sm:$0xff]
    %v80 = vld [vmem:[#allocation3 + $0x8] sm:$0xff]
    %v81 = vld [vmem:[#allocation3 + $0x10] sm:$0xff]
    %v82 = vld [vmem:[#allocation3 + $0x18] sm:$0xff]
    %v83 = vld [vmem:[#allocation3 + $0x20] sm:$0xff]
    %v84 = vld [vmem:[#allocation3 + $0x28] sm:$0xff]
    %v85 = vld [vmem:[#allocation3 + $0x30] sm:$0xff]
    %v86 = vld [vmem:[#allocation3 + $0x38] sm:$0xff]
    %v87 = vld [vmem:[#allocation6] sm:$0xff]
    %v88 = vld [vmem:[#allocation6 + $0x8] sm:$0xff]
    %v89 = vld [vmem:[#allocation6 + $0x10] sm:$0xff]
    %v90 = vld [vmem:[#allocation6 + $0x18] sm:$0xff]
    %v91 = vld [vmem:[#allocation6 + $0x20] sm:$0xff]
    %v92 = vld [vmem:[#allocation6 + $0x28] sm:$0xff]
    %v93 = vld [vmem:[#allocation6 + $0x30] sm:$0xff]
    %v94 = vld [vmem:[#allocation6 + $0x38] sm:$0xff]
    %v95 = vld [vmem:[#allocation6 + $0x40] sm:$0xff]
    %v96 = vld [vmem:[#allocation6 + $0x48] sm:$0xff]
    %v97 = vld [vmem:[#allocation6 + $0x50] sm:$0xff]
    %v98 = vld [vmem:[#allocation6 + $0x58] sm:$0xff]
    %v99 = vld [vmem:[#allocation6 + $0x60] sm:$0xff]
    %v100 = vld [vmem:[#allocation6 + $0x68] sm:$0xff]
    %v101 = vld [vmem:[#allocation6 + $0x70] sm:$0xff]
    %v102 = vld [vmem:[#allocation6 + $0x78] sm:$0xff]
    %v103 = vld [vmem:[#allocation6 + $0x80] sm:$0xff]
    %v104 = vld [vmem:[#allocation6 + $0x88] sm:$0xff]
    %v105 = vld [vmem:[#allocation6 + $0x90] sm:$0xff]
    %v106 = vld [vmem:[#allocation6 + $0x98] sm:$0xff]
    %v107 = vld [vmem:[#allocation6 + $0xa0] sm:$0xff]
    %v108 = vld [vmem:[#allocation6 + $0xa8] sm:$0xff]
    %v109 = vld [vmem:[#allocation6 + $0xb0] sm:$0xff]
    %v110 = vld [vmem:[#allocation6 + $0xb8] sm:$0xff]
    %v111 = vld [vmem:[#allocation6 + $0xc0] sm:$0xff]
    %v112 = vld [vmem:[#allocation6 + $0xc8] sm:$0xff]
    %v113 = vld [vmem:[#allocation6 + $0xd0] sm:$0xff]
    %v114 = vld [vmem:[#allocation6 + $0xd8] sm:$0xff]
    %v115 = vld [vmem:[#allocation6 + $0xe0] sm:$0xff]
    %v116 = vld [vmem:[#allocation6 + $0xe8] sm:$0xff]
    %v117 = vld [vmem:[#allocation6 + $0xf0] sm:$0xff]
    %v118 = vld [vmem:[#allocation6 + $0xf8] sm:$0xff]
    %v119 = vld [vmem:[#allocation6 + $0x100] sm:$0xff]
    %v120 = vld [vmem:[#allocation6 + $0x108] sm:$0xff]
    %v121 = vld [vmem:[#allocation6 + $0x110] sm:$0xff]
    %v122 = vld [vmem:[#allocation6 + $0x118] sm:$0xff]
    %v123 = vld [vmem:[#allocation6 + $0x120] sm:$0xff]
    %v124 = vld [vmem:[#allocation6 + $0x128] sm:$0xff]
    %v125 = vld [vmem:[#allocation6 + $0x130] sm:$0xff]
    %v126 = vld [vmem:[#allocation6 + $0x138] sm:$0xff]
    %v127 = vld [vmem:[#allocation6 + $0x140] sm:$0xff]
    %v128 = vld [vmem:[#allocation6 + $0x148] sm:$0xff]
    %v129 = vld [vmem:[#allocation6 + $0x150] sm:$0xff]
    %v130 = vld [vmem:[#allocation6 + $0x158] sm:$0xff]
    %v131 = vld [vmem:[#allocation6 + $0x160] sm:$0xff]
    %v132 = vld [vmem:[#allocation6 + $0x168] sm:$0xff]
    %v133 = vld [vmem:[#allocation6 + $0x170] sm:$0xff]
    %v134 = vld [vmem:[#allocation6 + $0x178] sm:$0xff]
    %v135 = vld [vmem:[#allocation6 + $0x180] sm:$0xff]
    %v136 = vld [vmem:[#allocation6 + $0x188] sm:$0xff]
    %v137 = vld [vmem:[#allocation6 + $0x190] sm:$0xff]
    %v138 = vld [vmem:[#allocation6 + $0x198] sm:$0xff]
    %v139 = vld [vmem:[#allocation6 + $0x1a0] sm:$0xff]
    %v140 = vld [vmem:[#allocation6 + $0x1a8] sm:$0xff]
    %v141 = vld [vmem:[#allocation6 + $0x1b0] sm:$0xff]
    %v142 = vld [vmem:[#allocation6 + $0x1b8] sm:$0xff]
    %v143 = vld [vmem:[#allocation6 + $0x1c0] sm:$0xff]
    %v144 = vld [vmem:[#allocation6 + $0x1c8] sm:$0xff]
    %v145 = vld [vmem:[#allocation6 + $0x1d0] sm:$0xff]
    %v146 = vld [vmem:[#allocation6 + $0x1d8] sm:$0xff]
    %v147 = vld [vmem:[#allocation6 + $0x1e0] sm:$0xff]
    %v148 = vld [vmem:[#allocation6 + $0x1e8] sm:$0xff]
    %v149 = vld [vmem:[#allocation6 + $0x1f0] sm:$0xff]
    %v150 = vld [vmem:[#allocation6 + $0x1f8] sm:$0xff]
    %v151 = vld [vmem:[%s3] sm:$0xf]
    %v153 = vlaneseq
    %v154 = vshrl.u32 %v153, 7
    %v155 = vsub.s32 0, %v154
    %v156 = vrot.slane %v151, %v155
    %v157 = vlaneseq
    %v158 = vshrl.u32 %v157, 7
    %v159 = vsub.s32 1, %v158
    %v160 = vrot.slane %v151, %v159
    %v161 = vlaneseq
    %v162 = vshrl.u32 %v161, 7
    %v163 = vsub.s32 2, %v162
    %v164 = vrot.slane %v151, %v163
    %v165 = vlaneseq
    %v166 = vshrl.u32 %v165, 7
    %v167 = vsub.s32 3, %v166
    %v168 = vrot.slane %v151, %v167
    %173 = vmatprep.subr.mxu0 %v88
    %174 = vmatpush1.msra.mxu0 %v87
    %175 = vmatprep.subr.mxu0 %v92
    %176 = vmatpush1.msra.mxu0 %v91
    %177 = vmatprep.subr.mxu0 %v96
    %178 = vmatpush1.msra.mxu0 %v95
    %179 = vmatprep.subr.mxu0 %v100
    %180 = vmatpush1.msra.mxu0 %v99
    %181 = vmatprep.subr.mxu0 %v104
    %182 = vmatpush1.msra.mxu0 %v103
    %183 = vmatprep.subr.mxu0 %v108
    %184 = vmatpush1.msra.mxu0 %v107
    %185 = vmatprep.subr.mxu0 %v112
    %186 = vmatpush1.msra.mxu0 %v111
    %187 = vmatprep.subr.mxu0 %v116
    %188 = vmatpush1.msra.mxu0 %v115
    %189 = vmatprep.subr.mxu0 %v120
    %190 = vmatpush1.msra.mxu0 %v119
    %191 = vmatprep.subr.mxu0 %v124
    %192 = vmatpush1.msra.mxu0 %v123
    %193 = vmatprep.subr.mxu0 %v128
    %194 = vmatpush1.msra.mxu0 %v127
    %195 = vmatprep.subr.mxu0 %v132
    %196 = vmatpush1.msra.mxu0 %v131
    %197 = vmatprep.subr.mxu0 %v136
    %198 = vmatpush1.msra.mxu0 %v135
    %199 = vmatprep.subr.mxu0 %v140
    %200 = vmatpush1.msra.mxu0 %v139
    %201 = vmatprep.subr.mxu0 %v144
    %202 = vmatpush1.msra.mxu0 %v143
    %203 = vmatprep.subr.mxu0 %v148
    %204 = vmatpush1.msra.mxu0 %v147
    %205 = vmatprep.subr.mxu0 0.0
    %206 = vmatpush1.msra.mxu0 0.0
    %207 = vmatprep.subr.mxu0 0.0
    %208 = vmatpush1.msra.mxu0 0.0
    %209 = vmatprep.subr.mxu0 0.0
    %210 = vmatpush1.msra.mxu0 0.0
    %211 = vmatprep.subr.mxu0 0.0
    %212 = vmatpush1.msra.mxu0 0.0
    %213 = vmatprep.subr.mxu0 0.0
    %214 = vmatpush1.msra.mxu0 0.0
    %215 = vmatprep.subr.mxu0 0.0
    %216 = vmatpush1.msra.mxu0 0.0
    %217 = vmatprep.subr.mxu0 0.0
    %218 = vmatpush1.msra.mxu0 0.0
    %219 = vmatprep.subr.mxu0 0.0
    %220 = vmatpush1.msra.mxu0 0.0
    %221 = vmatprep.subr.mxu0 0.0
    %222 = vmatpush1.msra.mxu0 0.0
    %223 = vmatprep.subr.mxu0 0.0
    %224 = vmatpush1.msra.mxu0 0.0
    %225 = vmatprep.subr.mxu0 0.0
    %226 = vmatpush1.msra.mxu0 0.0
    %227 = vmatprep.subr.mxu0 0.0
    %228 = vmatpush1.msra.mxu0 0.0
    %229 = vmatprep.subr.mxu0 0.0
    %230 = vmatpush1.msra.mxu0 0.0
    %231 = vmatprep.subr.mxu0 0.0
    %232 = vmatpush1.msra.mxu0 0.0
    %233 = vmatprep.subr.mxu0 0.0
    %234 = vmatpush1.msra.mxu0 0.0
    %235 = vmatprep.subr.mxu0 0.0
    %236 = vmatpush1.msra.mxu0 0.0
    %237 = vmatprep.mubr.f32.mxu0 0.0
    %238 = vmatmul.mubr.f32.gmra.mrb[0].mxu0 %v79
    %v239 = vpop.f32.mrb[0].mxu0
    %v240 = vadd.f32 %v156, %v239
    %v241 = vpop.f32.mrb[0].mxu0
    %v242 = vadd.f32 %v160, %v241
    %243 = vmatprep.mubr.f32.mxu0 0.0
    %244 = vmatmul.mubr.f32.gmra.mrb[0].mxu0 %v80
    %v245 = vpop.f32.mrb[0].mxu0
    %v246 = vadd.f32 %v156, %v245
    %v247 = vpop.f32.mrb[0].mxu0
    %v248 = vadd.f32 %v160, %v247
    %249 = vmatprep.mubr.f32.mxu0 0.0
    %250 = vmatmul.mubr.f32.gmra.mrb[0].mxu0 %v81
    %v251 = vpop.f32.mrb[0].mxu0
    %v252 = vadd.f32 %v156, %v251
    %v253 = vpop.f32.mrb[0].mxu0
    %v254 = vadd.f32 %v160, %v253
    %255 = vmatprep.mubr.f32.mxu0 0.0
    %256 = vmatmul.mubr.f32.gmra.mrb[0].mxu0 %v82
    %v257 = vpop.f32.mrb[0].mxu0
    %v258 = vadd.f32 %v156, %v257
    %v259 = vpop.f32.mrb[0].mxu0
    %v260 = vadd.f32 %v160, %v259
    %261 = vmatprep.mubr.f32.mxu0 0.0
    %262 = vmatmul.mubr.f32.gmra.mrb[0].mxu0 %v83
    %v263 = vpop.f32.mrb[0].mxu0
    %v264 = vadd.f32 %v156, %v263
    %v265 = vpop.f32.mrb[0].mxu0
    %v266 = vadd.f32 %v160, %v265
    %267 = vmatprep.mubr.f32.mxu0 0.0
    %268 = vmatmul.mubr.f32.gmra.mrb[0].mxu0 %v84
    %v269 = vpop.f32.mrb[0].mxu0
    %v270 = vadd.f32 %v156, %v269
    %v271 = vpop.f32.mrb[0].mxu0
    %v272 = vadd.f32 %v160, %v271
    %273 = vmatprep.mubr.f32.mxu0 0.0
    %274 = vmatmul.mubr.f32.gmra.mrb[0].mxu0 %v85
    %v275 = vpop.f32.mrb[0].mxu0
    %v276 = vadd.f32 %v156, %v275
    %v277 = vpop.f32.mrb[0].mxu0
    %v278 = vadd.f32 %v160, %v277
    %279 = vmatprep.mubr.f32.mxu0 0.0
    %280 = vmatmul.mubr.f32.gmra.mrb[0].mxu0 %v86
    %v281 = vpop.f32.mrb[0].mxu0
    %v282 = vadd.f32 %v156, %v281
    %v283 = vpop.f32.mrb[0].mxu0
    %v284 = vadd.f32 %v160, %v283
    %285 = vdwg.mxu0
    %286 = vmatprep.subr.mxu0 %v90
    %287 = vmatpush1.msra.mxu0 %v89
    %288 = vmatprep.subr.mxu0 %v94
    %289 = vmatpush1.msra.mxu0 %v93
    %290 = vmatprep.subr.mxu0 %v98
    %291 = vmatpush1.msra.mxu0 %v97
    %292 = vmatprep.subr.mxu0 %v102
    %293 = vmatpush1.msra.mxu0 %v101
    %294 = vmatprep.subr.mxu0 %v106
    %295 = vmatpush1.msra.mxu0 %v105
    %296 = vmatprep.subr.mxu0 %v110
    %297 = vmatpush1.msra.mxu0 %v109
    %298 = vmatprep.subr.mxu0 %v114
    %299 = vmatpush1.msra.mxu0 %v113
    %300 = vmatprep.subr.mxu0 %v118
    %301 = vmatpush1.msra.mxu0 %v117
    %302 = vmatprep.subr.mxu0 %v122
    %303 = vmatpush1.msra.mxu0 %v121
    %304 = vmatprep.subr.mxu0 %v126
    %305 = vmatpush1.msra.mxu0 %v125
    %306 = vmatprep.subr.mxu0 %v130
    %307 = vmatpush1.msra.mxu0 %v129
    %308 = vmatprep.subr.mxu0 %v134
    %309 = vmatpush1.msra.mxu0 %v133
    %310 = vmatprep.subr.mxu0 %v138
    %311 = vmatpush1.msra.mxu0 %v137
    %312 = vmatprep.subr.mxu0 %v142
    %313 = vmatpush1.msra.mxu0 %v141
    %314 = vmatprep.subr.mxu0 %v146
    %315 = vmatpush1.msra.mxu0 %v145
    %316 = vmatprep.subr.mxu0 %v150
    %317 = vmatpush1.msra.mxu0 %v149
    %318 = vmatprep.subr.mxu0 0.0
    %319 = vmatpush1.msra.mxu0 0.0
    %320 = vmatprep.subr.mxu0 0.0
    %321 = vmatpush1.msra.mxu0 0.0
    %322 = vmatprep.subr.mxu0 0.0
    %323 = vmatpush1.msra.mxu0 0.0
    %324 = vmatprep.subr.mxu0 0.0
    %325 = vmatpush1.msra.mxu0 0.0
    %326 = vmatprep.subr.mxu0 0.0
    %327 = vmatpush1.msra.mxu0 0.0
    %328 = vmatprep.subr.mxu0 0.0
    %329 = vmatpush1.msra.mxu0 0.0
    %330 = vmatprep.subr.mxu0 0.0
    %331 = vmatpush1.msra.mxu0 0.0
    %332 = vmatprep.subr.mxu0 0.0
    %333 = vmatpush1.msra.mxu0 0.0
    %334 = vmatprep.subr.mxu0 0.0
    %335 = vmatpush1.msra.mxu0 0.0
    %336 = vmatprep.subr.mxu0 0.0
    %337 = vmatpush1.msra.mxu0 0.0
    %338 = vmatprep.subr.mxu0 0.0
    %339 = vmatpush1.msra.mxu0 0.0
    %340 = vmatprep.subr.mxu0 0.0
    %341 = vmatpush1.msra.mxu0 0.0
    %342 = vmatprep.subr.mxu0 0.0
    %343 = vmatpush1.msra.mxu0 0.0
    %344 = vmatprep.subr.mxu0 0.0
    %345 = vmatpush1.msra.mxu0 0.0
    %346 = vmatprep.subr.mxu0 0.0
    %347 = vmatpush1.msra.mxu0 0.0
    %348 = vmatprep.subr.mxu0 0.0
    %349 = vmatpush1.msra.mxu0 0.0
    %350 = vmatprep.mubr.f32.mxu0 0.0
    %351 = vmatmul.mubr.f32.gmra.mrb[0].mxu0 %v79
    %v352 = vpop.f32.mrb[0].mxu0
    %v353 = vadd.f32 %v164, %v352
    %v354 = vpop.f32.mrb[0].mxu0
    %v355 = vadd.f32 %v168, %v354
    %356 = vmatprep.mubr.f32.mxu0 0.0
    %357 = vmatmul.mubr.f32.gmra.mrb[0].mxu0 %v80
    %v358 = vpop.f32.mrb[0].mxu0
    %v359 = vadd.f32 %v164, %v358
    %v360 = vpop.f32.mrb[0].mxu0
    %v361 = vadd.f32 %v168, %v360
    %362 = vmatprep.mubr.f32.mxu0 0.0
    %363 = vmatmul.mubr.f32.gmra.mrb[0].mxu0 %v81
    %v364 = vpop.f32.mrb[0].mxu0
    %v365 = vadd.f32 %v164, %v364
    %v366 = vpop.f32.mrb[0].mxu0
    %v367 = vadd.f32 %v168, %v366
    %368 = vmatprep.mubr.f32.mxu0 0.0
    %369 = vmatmul.mubr.f32.gmra.mrb[0].mxu0 %v82
    %v370 = vpop.f32.mrb[0].mxu0
    %v371 = vadd.f32 %v164, %v370
    %v372 = vpop.f32.mrb[0].mxu0
    %v373 = vadd.f32 %v168, %v372
    %374 = vmatprep.mubr.f32.mxu0 0.0
    %375 = vmatmul.mubr.f32.gmra.mrb[0].mxu0 %v83
    %v376 = vpop.f32.mrb[0].mxu0
    %v377 = vadd.f32 %v164, %v376
    %v378 = vpop.f32.mrb[0].mxu0
    %v379 = vadd.f32 %v168, %v378
    %380 = vmatprep.mubr.f32.mxu0 0.0
    %381 = vmatmul.mubr.f32.gmra.mrb[0].mxu0 %v84
    %v382 = vpop.f32.mrb[0].mxu0
    %v383 = vadd.f32 %v164, %v382
    %v384 = vpop.f32.mrb[0].mxu0
    %v385 = vadd.f32 %v168, %v384
    %386 = vmatprep.mubr.f32.mxu0 0.0
    %387 = vmatmul.mubr.f32.gmra.mrb[0].mxu0 %v85
    %v388 = vpop.f32.mrb[0].mxu0
    %v389 = vadd.f32 %v164, %v388
    %v390 = vpop.f32.mrb[0].mxu0
    %v391 = vadd.f32 %v168, %v390
    %392 = vmatprep.mubr.f32.mxu0 0.0
    %393 = vmatmul.mubr.f32.gmra.mrb[0].mxu0 %v86
    %v394 = vpop.f32.mrb[0].mxu0
    %v395 = vadd.f32 %v164, %v394
    %v396 = vpop.f32.mrb[0].mxu0
    %v397 = vadd.f32 %v168, %v396
    %398 = vdwg.mxu0
    %399 = vst [vmem:[#allocation2] sm:$0xff] %v240
    %400 = vst [vmem:[#allocation2 + $0x8] sm:$0xff] %v242
    %401 = vst [vmem:[#allocation2 + $0x10] sm:$0xff] %v353
    %402 = vst [vmem:[#allocation2 + $0x18] sm:$0xff] %v355
    %403 = vst [vmem:[#allocation2 + $0x20] sm:$0xff] %v246
    %404 = vst [vmem:[#allocation2 + $0x28] sm:$0xff] %v248
    %405 = vst [vmem:[#allocation2 + $0x30] sm:$0xff] %v359
    %406 = vst [vmem:[#allocation2 + $0x38] sm:$0xff] %v361
    %407 = vst [vmem:[#allocation2 + $0x40] sm:$0xff] %v252
    %408 = vst [vmem:[#allocation2 + $0x48] sm:$0xff] %v254
    %409 = vst [vmem:[#allocation2 + $0x50] sm:$0xff] %v365
    %410 = vst [vmem:[#allocation2 + $0x58] sm:$0xff] %v367
    %411 = vst [vmem:[#allocation2 + $0x60] sm:$0xff] %v258
    %412 = vst [vmem:[#allocation2 + $0x68] sm:$0xff] %v260
    %413 = vst [vmem:[#allocation2 + $0x70] sm:$0xff] %v371
    %414 = vst [vmem:[#allocation2 + $0x78] sm:$0xff] %v373
    %415 = vst [vmem:[#allocation2 + $0x80] sm:$0xff] %v264
    %416 = vst [vmem:[#allocation2 + $0x88] sm:$0xff] %v266
    %417 = vst [vmem:[#allocation2 + $0x90] sm:$0xff] %v377
    %418 = vst [vmem:[#allocation2 + $0x98] sm:$0xff] %v379
    %419 = vst [vmem:[#allocation2 + $0xa0] sm:$0xff] %v270
    %420 = vst [vmem:[#allocation2 + $0xa8] sm:$0xff] %v272
    %421 = vst [vmem:[#allocation2 + $0xb0] sm:$0xff] %v383
    %422 = vst [vmem:[#allocation2 + $0xb8] sm:$0xff] %v385
    %423 = vst [vmem:[#allocation2 + $0xc0] sm:$0xff] %v276
    %424 = vst [vmem:[#allocation2 + $0xc8] sm:$0xff] %v278
    %425 = vst [vmem:[#allocation2 + $0xd0] sm:$0xff] %v389
    %426 = vst [vmem:[#allocation2 + $0xd8] sm:$0xff] %v391
    %427 = vst [vmem:[#allocation2 + $0xe0] sm:$0xff] %v282
    %428 = vst [vmem:[#allocation2 + $0xe8] sm:$0xff] %v284
    %429 = vst [vmem:[#allocation2 + $0xf0] sm:$0xff] %v395
    %430 = vst [vmem:[#allocation2 + $0xf8] sm:$0xff] %v397
    %v431 = vld [vmem:[#allocation2] sm:$0xff]
    %v432 = vld [vmem:[#allocation2 + $0x8] sm:$0xff]
    %v433 = vld [vmem:[#allocation2 + $0x10] sm:$0xff]
    %v434 = vld [vmem:[#allocation2 + $0x18] sm:$0xff]
    %v435 = vld [vmem:[#allocation8] sm:$0xff]
    %v436 = vld [vmem:[#allocation8 + $0x8] sm:$0xff]
    %v437 = vld [vmem:[#allocation8 + $0x10] sm:$0xff]
    %v438 = vld [vmem:[#allocation8 + $0x18] sm:$0xff]
    %v439 = vld [vmem:[#allocation8 + $0x20] sm:$0xff]
    %v440 = vld [vmem:[#allocation8 + $0x28] sm:$0xff]
    %v441 = vld [vmem:[#allocation8 + $0x30] sm:$0xff]
    %v442 = vld [vmem:[#allocation8 + $0x38] sm:$0xff]
    %v443 = vld [vmem:[#allocation8 + $0x40] sm:$0xff]
    %v444 = vld [vmem:[#allocation8 + $0x48] sm:$0xff]
    %v445 = vld [vmem:[#allocation8 + $0x50] sm:$0xff]
    %v446 = vld [vmem:[#allocation8 + $0x58] sm:$0xff]
    %v447 = vld [vmem:[#allocation8 + $0x60] sm:$0xff]
    %v448 = vld [vmem:[#allocation8 + $0x68] sm:$0xff]
    %v449 = vld [vmem:[#allocation8 + $0x70] sm:$0xff]
    %v450 = vld [vmem:[#allocation8 + $0x78] sm:$0xff]
    %v451 = vld [vmem:[#allocation8 + $0x80] sm:$0xff]
    %v452 = vld [vmem:[#allocation8 + $0x88] sm:$0xff]
    %v453 = vld [vmem:[#allocation8 + $0x90] sm:$0xff]
    %v454 = vld [vmem:[#allocation8 + $0x98] sm:$0xff]
    %v455 = vld [vmem:[#allocation8 + $0xa0] sm:$0xff]
    %v456 = vld [vmem:[#allocation8 + $0xa8] sm:$0xff]
    %v457 = vld [vmem:[#allocation8 + $0xb0] sm:$0xff]
    %v458 = vld [vmem:[#allocation8 + $0xb8] sm:$0xff]
    %v459 = vld [vmem:[#allocation8 + $0xc0] sm:$0xff]
    %v460 = vld [vmem:[#allocation8 + $0xc8] sm:$0xff]
    %v461 = vld [vmem:[#allocation8 + $0xd0] sm:$0xff]
    %v462 = vld [vmem:[#allocation8 + $0xd8] sm:$0xff]
    %v463 = vld [vmem:[#allocation8 + $0xe0] sm:$0xff]
    %v464 = vld [vmem:[#allocation8 + $0xe8] sm:$0xff]
    %v465 = vld [vmem:[#allocation8 + $0xf0] sm:$0xff]
    %v466 = vld [vmem:[#allocation8 + $0xf8] sm:$0xff]
    %v467 = vld [vmem:[#allocation8 + $0x100] sm:$0xff]
    %v468 = vld [vmem:[#allocation8 + $0x108] sm:$0xff]
    %v469 = vld [vmem:[#allocation8 + $0x110] sm:$0xff]
    %v470 = vld [vmem:[#allocation8 + $0x118] sm:$0xff]
    %v471 = vld [vmem:[#allocation8 + $0x120] sm:$0xff]
    %v472 = vld [vmem:[#allocation8 + $0x128] sm:$0xff]
    %v473 = vld [vmem:[#allocation8 + $0x130] sm:$0xff]
    %v474 = vld [vmem:[#allocation8 + $0x138] sm:$0xff]
    %v475 = vld [vmem:[#allocation8 + $0x140] sm:$0xff]
    %v476 = vld [vmem:[#allocation8 + $0x148] sm:$0xff]
    %v477 = vld [vmem:[#allocation8 + $0x150] sm:$0xff]
    %v478 = vld [vmem:[#allocation8 + $0x158] sm:$0xff]
    %v479 = vld [vmem:[#allocation8 + $0x160] sm:$0xff]
    %v480 = vld [vmem:[#allocation8 + $0x168] sm:$0xff]
    %v481 = vld [vmem:[#allocation8 + $0x170] sm:$0xff]
    %v482 = vld [vmem:[#allocation8 + $0x178] sm:$0xff]
    %v483 = vld [vmem:[#allocation8 + $0x180] sm:$0xff]
    %v484 = vld [vmem:[#allocation8 + $0x188] sm:$0xff]
    %v485 = vld [vmem:[#allocation8 + $0x190] sm:$0xff]
    %v486 = vld [vmem:[#allocation8 + $0x198] sm:$0xff]
    %v487 = vld [vmem:[#allocation8 + $0x1a0] sm:$0xff]
    %v488 = vld [vmem:[#allocation8 + $0x1a8] sm:$0xff]
    %v489 = vld [vmem:[#allocation8 + $0x1b0] sm:$0xff]
    %v490 = vld [vmem:[#allocation8 + $0x1b8] sm:$0xff]
    %v491 = vld [vmem:[#allocation8 + $0x1c0] sm:$0xff]
    %v492 = vld [vmem:[#allocation8 + $0x1c8] sm:$0xff]
    %v493 = vld [vmem:[#allocation8 + $0x1d0] sm:$0xff]
    %v494 = vld [vmem:[#allocation8 + $0x1d8] sm:$0xff]
    %v495 = vld [vmem:[#allocation8 + $0x1e0] sm:$0xff]
    %v496 = vld [vmem:[#allocation8 + $0x1e8] sm:$0xff]
    %v497 = vld [vmem:[#allocation8 + $0x1f0] sm:$0xff]
    %v498 = vld [vmem:[#allocation8 + $0x1f8] sm:$0xff]
    %499 = vmatprep.subr.mxu0 %v436
    %500 = vmatpush1.msra.mxu0 %v435
    %501 = vmatprep.subr.mxu0 %v440
    %502 = vmatpush1.msra.mxu0 %v439
    %503 = vmatprep.subr.mxu0 %v444
    %504 = vmatpush1.msra.mxu0 %v443
    %505 = vmatprep.subr.mxu0 %v448
    %506 = vmatpush1.msra.mxu0 %v447
    %507 = vmatprep.subr.mxu0 %v452
    %508 = vmatpush1.msra.mxu0 %v451
    %509 = vmatprep.subr.mxu0 %v456
    %510 = vmatpush1.msra.mxu0 %v455
    %511 = vmatprep.subr.mxu0 %v460
    %512 = vmatpush1.msra.mxu0 %v459
    %513 = vmatprep.subr.mxu0 %v464
    %514 = vmatpush1.msra.mxu0 %v463
    %515 = vmatprep.subr.mxu0 %v468
    %516 = vmatpush1.msra.mxu0 %v467
    %517 = vmatprep.subr.mxu0 %v472
    %518 = vmatpush1.msra.mxu0 %v471
    %519 = vmatprep.subr.mxu0 %v476
    %520 = vmatpush1.msra.mxu0 %v475
    %521 = vmatprep.subr.mxu0 %v480
    %522 = vmatpush1.msra.mxu0 %v479
    %523 = vmatprep.subr.mxu0 %v484
    %524 = vmatpush1.msra.mxu0 %v483
    %525 = vmatprep.subr.mxu0 %v488
    %526 = vmatpush1.msra.mxu0 %v487
    %527 = vmatprep.subr.mxu0 %v492
    %528 = vmatpush1.msra.mxu0 %v491
    %529 = vmatprep.subr.mxu0 %v496
    %530 = vmatpush1.msra.mxu0 %v495
    %531 = vmatprep.subr.mxu0 0.0
    %532 = vmatpush1.msra.mxu0 0.0
    %533 = vmatprep.subr.mxu0 0.0
    %534 = vmatpush1.msra.mxu0 0.0
    %535 = vmatprep.subr.mxu0 0.0
    %536 = vmatpush1.msra.mxu0 0.0
    %537 = vmatprep.subr.mxu0 0.0
    %538 = vmatpush1.msra.mxu0 0.0
    %539 = vmatprep.subr.mxu0 0.0
    %540 = vmatpush1.msra.mxu0 0.0
    %541 = vmatprep.subr.mxu0 0.0
    %542 = vmatpush1.msra.mxu0 0.0
    %543 = vmatprep.subr.mxu0 0.0
    %544 = vmatpush1.msra.mxu0 0.0
    %545 = vmatprep.subr.mxu0 0.0
    %546 = vmatpush1.msra.mxu0 0.0
    %547 = vmatprep.subr.mxu0 0.0
    %548 = vmatpush1.msra.mxu0 0.0
    %549 = vmatprep.subr.mxu0 0.0
    %550 = vmatpush1.msra.mxu0 0.0
    %551 = vmatprep.subr.mxu0 0.0
    %552 = vmatpush1.msra.mxu0 0.0
    %553 = vmatprep.subr.mxu0 0.0
    %554 = vmatpush1.msra.mxu0 0.0
    %555 = vmatprep.subr.mxu0 0.0
    %556 = vmatpush1.msra.mxu0 0.0
    %557 = vmatprep.subr.mxu0 0.0
    %558 = vmatpush1.msra.mxu0 0.0
    %559 = vmatprep.subr.mxu0 0.0
    %560 = vmatpush1.msra.mxu0 0.0
    %561 = vmatprep.subr.mxu0 0.0
    %562 = vmatpush1.msra.mxu0 0.0
    %563 = vmatprep.mubr.f32.mxu0 0.0
    %564 = vmatmul.mubr.f32.gmra.mrb[0].mxu0 0.0
    %v565 = vpop.f32.mrb[0].mxu0
    %v566 = vadd.f32 0.0, %v565
    %v567 = vpop.f32.mrb[0].mxu0
    %v568 = vadd.f32 0.0, %v567
    %569 = vdwg.mxu0
    %570 = vmatprep.subr.mxu0 %v438
    %571 = vmatpush1.msra.mxu0 %v437
    %572 = vmatprep.subr.mxu0 %v442
    %573 = vmatpush1.msra.mxu0 %v441
    %574 = vmatprep.subr.mxu0 %v446
    %575 = vmatpush1.msra.mxu0 %v445
    %576 = vmatprep.subr.mxu0 %v450
    %577 = vmatpush1.msra.mxu0 %v449
    %578 = vmatprep.subr.mxu0 %v454
    %579 = vmatpush1.msra.mxu0 %v453
    %580 = vmatprep.subr.mxu0 %v458
    %581 = vmatpush1.msra.mxu0 %v457
    %582 = vmatprep.subr.mxu0 %v462
    %583 = vmatpush1.msra.mxu0 %v461
    %584 = vmatprep.subr.mxu0 %v466
    %585 = vmatpush1.msra.mxu0 %v465
    %586 = vmatprep.subr.mxu0 %v470
    %587 = vmatpush1.msra.mxu0 %v469
    %588 = vmatprep.subr.mxu0 %v474
    %589 = vmatpush1.msra.mxu0 %v473
    %590 = vmatprep.subr.mxu0 %v478
    %591 = vmatpush1.msra.mxu0 %v477
    %592 = vmatprep.subr.mxu0 %v482
    %593 = vmatpush1.msra.mxu0 %v481
    %594 = vmatprep.subr.mxu0 %v486
    %595 = vmatpush1.msra.mxu0 %v485
    %596 = vmatprep.subr.mxu0 %v490
    %597 = vmatpush1.msra.mxu0 %v489
    %598 = vmatprep.subr.mxu0 %v494
    %599 = vmatpush1.msra.mxu0 %v493
    %600 = vmatprep.subr.mxu0 %v498
    %601 = vmatpush1.msra.mxu0 %v497
    %602 = vmatprep.subr.mxu0 0.0
    %603 = vmatpush1.msra.mxu0 0.0
    %604 = vmatprep.subr.mxu0 0.0
    %605 = vmatpush1.msra.mxu0 0.0
    %606 = vmatprep.subr.mxu0 0.0
    %607 = vmatpush1.msra.mxu0 0.0
    %608 = vmatprep.subr.mxu0 0.0
    %609 = vmatpush1.msra.mxu0 0.0
    %610 = vmatprep.subr.mxu0 0.0
    %611 = vmatpush1.msra.mxu0 0.0
    %612 = vmatprep.subr.mxu0 0.0
    %613 = vmatpush1.msra.mxu0 0.0
    %614 = vmatprep.subr.mxu0 0.0
    %615 = vmatpush1.msra.mxu0 0.0
    %616 = vmatprep.subr.mxu0 0.0
    %617 = vmatpush1.msra.mxu0 0.0
    %618 = vmatprep.subr.mxu0 0.0
    %619 = vmatpush1.msra.mxu0 0.0
    %620 = vmatprep.subr.mxu0 0.0
    %621 = vmatpush1.msra.mxu0 0.0
    %622 = vmatprep.subr.mxu0 0.0
    %623 = vmatpush1.msra.mxu0 0.0
    %624 = vmatprep.subr.mxu0 0.0
    %625 = vmatpush1.msra.mxu0 0.0
    %626 = vmatprep.subr.mxu0 0.0
    %627 = vmatpush1.msra.mxu0 0.0
    %628 = vmatprep.subr.mxu0 0.0
    %629 = vmatpush1.msra.mxu0 0.0
    %630 = vmatprep.subr.mxu0 0.0
    %631 = vmatpush1.msra.mxu0 0.0
    %632 = vmatprep.subr.mxu0 0.0
    %633 = vmatpush1.msra.mxu0 0.0
    %634 = vmatprep.mubr.f32.mxu0 0.0
    %635 = vmatmul.mubr.f32.gmra.mrb[0].mxu0 0.0
    %v636 = vpop.f32.mrb[0].mxu0
    %v637 = vadd.f32 0.0, %v636
    %v638 = vpop.f32.mrb[0].mxu0
    %v639 = vadd.f32 0.0, %v638
    %640 = vdwg.mxu0
    %v641 = vadd.f32 %v431, %v566
    %v642 = vadd.f32 %v432, %v568
    %v643 = vadd.f32 %v433, %v637
    %v644 = vadd.f32 %v434, %v639
    %v645 = vmul.f32 %v641, 0.5
    %v646 = vtanh.pop %v645
    %v647 = vmul.f32 %v646, 0.5
    %v648 = vadd.f32 %v647, 0.5
    %v649 = vmul.f32 %v642, 0.5
    %v650 = vtanh.pop %v649
    %v651 = vmul.f32 %v650, 0.5
    %v652 = vadd.f32 %v651, 0.5
    %v653 = vtanh.pop %v643
    %v654 = vmul.f32 %v644, 0.5
    %v655 = vtanh.pop %v654
    %v656 = vmul.f32 %v655, 0.5
    %v657 = vadd.f32 %v656, 0.5
    %v658 = vmul.f32 %v652, 0.0
    %v659 = vmul.f32 %v648, %v653
    %v660 = vadd.f32 %v658, %v659
    %v661 = vtanh.pop %v660
    %v662 = vmul.f32 %v657, %v661
    %s663 = scalar_lea.vmem [#allocation2], 32
    %v664 = vld [vmem:[%s663] sm:$0xff]
    %v665 = vld [vmem:[%s663 + $0x8] sm:$0xff]
    %v666 = vld [vmem:[%s663 + $0x10] sm:$0xff]
    %v667 = vld [vmem:[%s663 + $0x18] sm:$0xff]
    %668 = vmatprep.subr.mxu0 %v436
    %669 = vmatpush1.msra.mxu0 %v435
    %670 = vmatprep.subr.mxu0 %v440
    %671 = vmatpush1.msra.mxu0 %v439
    %672 = vmatprep.subr.mxu0 %v444
    %673 = vmatpush1.msra.mxu0 %v443
    %674 = vmatprep.subr.mxu0 %v448
    %675 = vmatpush1.msra.mxu0 %v447
    %676 = vmatprep.subr.mxu0 %v452
    %677 = vmatpush1.msra.mxu0 %v451
    %678 = vmatprep.subr.mxu0 %v456
    %679 = vmatpush1.msra.mxu0 %v455
    %680 = vmatprep.subr.mxu0 %v460
    %681 = vmatpush1.msra.mxu0 %v459
    %682 = vmatprep.subr.mxu0 %v464
    %683 = vmatpush1.msra.mxu0 %v463
    %684 = vmatprep.subr.mxu0 %v468
    %685 = vmatpush1.msra.mxu0 %v467
    %686 = vmatprep.subr.mxu0 %v472
    %687 = vmatpush1.msra.mxu0 %v471
    %688 = vmatprep.subr.mxu0 %v476
    %689 = vmatpush1.msra.mxu0 %v475
    %690 = vmatprep.subr.mxu0 %v480
    %691 = vmatpush1.msra.mxu0 %v479
    %692 = vmatprep.subr.mxu0 %v484
    %693 = vmatpush1.msra.mxu0 %v483
    %694 = vmatprep.subr.mxu0 %v488
    %695 = vmatpush1.msra.mxu0 %v487
    %696 = vmatprep.subr.mxu0 %v492
    %697 = vmatpush1.msra.mxu0 %v491
    %698 = vmatprep.subr.mxu0 %v496
    %699 = vmatpush1.msra.mxu0 %v495
    %700 = vmatprep.subr.mxu0 0.0
    %701 = vmatpush1.msra.mxu0 0.0
    %702 = vmatprep.subr.mxu0 0.0
    %703 = vmatpush1.msra.mxu0 0.0
    %704 = vmatprep.subr.mxu0 0.0
    %705 = vmatpush1.msra.mxu0 0.0
    %706 = vmatprep.subr.mxu0 0.0
    %707 = vmatpush1.msra.mxu0 0.0
    %708 = vmatprep.subr.mxu0 0.0
    %709 = vmatpush1.msra.mxu0 0.0
    %710 = vmatprep.subr.mxu0 0.0
    %711 = vmatpush1.msra.mxu0 0.0
    %712 = vmatprep.subr.mxu0 0.0
    %713 = vmatpush1.msra.mxu0 0.0
    %714 = vmatprep.subr.mxu0 0.0
    %715 = vmatpush1.msra.mxu0 0.0
    %716 = vmatprep.subr.mxu0 0.0
    %717 = vmatpush1.msra.mxu0 0.0
    %718 = vmatprep.subr.mxu0 0.0
    %719 = vmatpush1.msra.mxu0 0.0
    %720 = vmatprep.subr.mxu0 0.0
    %721 = vmatpush1.msra.mxu0 0.0
    %722 = vmatprep.subr.mxu0 0.0
    %723 = vmatpush1.msra.mxu0 0.0
    %724 = vmatprep.subr.mxu0 0.0
    %725 = vmatpush1.msra.mxu0 0.0
    %726 = vmatprep.subr.mxu0 0.0
    %727 = vmatpush1.msra.mxu0 0.0
    %728 = vmatprep.subr.mxu0 0.0
    %729 = vmatpush1.msra.mxu0 0.0
    %730 = vmatprep.subr.mxu0 0.0
    %731 = vmatpush1.msra.mxu0 0.0
    %732 = vmatprep.mubr.f32.mxu0 0.0
    %733 = vmatmul.mubr.f32.gmra.mrb[0].mxu0 %v662
    %v734 = vpop.f32.mrb[0].mxu0
    %v735 = vadd.f32 0.0, %v734
    %v736 = vpop.f32.mrb[0].mxu0
    %v737 = vadd.f32 0.0, %v736
    %738 = vdwg.mxu0
    %739 = vmatprep.subr.mxu0 %v438
    %740 = vmatpush1.msra.mxu0 %v437
    %741 = vmatprep.subr.mxu0 %v442
    %742 = vmatpush1.msra.mxu0 %v441
    %743 = vmatprep.subr.mxu0 %v446
    %744 = vmatpush1.msra.mxu0 %v445
    %745 = vmatprep.subr.mxu0 %v450
    %746 = vmatpush1.msra.mxu0 %v449
    %747 = vmatprep.subr.mxu0 %v454
    %748 = vmatpush1.msra.mxu0 %v453
    %749 = vmatprep.subr.mxu0 %v458
    %750 = vmatpush1.msra.mxu0 %v457
    %751 = vmatprep.subr.mxu0 %v462
    %752 = vmatpush1.msra.mxu0 %v461
    %753 = vmatprep.subr.mxu0 %v466
    %754 = vmatpush1.msra.mxu0 %v465
    %755 = vmatprep.subr.mxu0 %v470
    %756 = vmatpush1.msra.mxu0 %v469
    %757 = vmatprep.subr.mxu0 %v474
    %758 = vmatpush1.msra.mxu0 %v473
    %759 = vmatprep.subr.mxu0 %v478
    %760 = vmatpush1.msra.mxu0 %v477
    %761 = vmatprep.subr.mxu0 %v482
    %762 = vmatpush1.msra.mxu0 %v481
    %763 = vmatprep.subr.mxu0 %v486
    %764 = vmatpush1.msra.mxu0 %v485
    %765 = vmatprep.subr.mxu0 %v490
    %766 = vmatpush1.msra.mxu0 %v489
    %767 = vmatprep.subr.mxu0 %v494
    %768 = vmatpush1.msra.mxu0 %v493
    %769 = vmatprep.subr.mxu0 %v498
    %770 = vmatpush1.msra.mxu0 %v497
    %771 = vmatprep.subr.mxu0 0.0
    %772 = vmatpush1.msra.mxu0 0.0
    %773 = vmatprep.subr.mxu0 0.0
    %774 = vmatpush1.msra.mxu0 0.0
    %775 = vmatprep.subr.mxu0 0.0
    %776 = vmatpush1.msra.mxu0 0.0
    %777 = vmatprep.subr.mxu0 0.0
    %778 = vmatpush1.msra.mxu0 0.0
    %779 = vmatprep.subr.mxu0 0.0
    %780 = vmatpush1.msra.mxu0 0.0
    %781 = vmatprep.subr.mxu0 0.0
    %782 = vmatpush1.msra.mxu0 0.0
    %783 = vmatprep.subr.mxu0 0.0
    %784 = vmatpush1.msra.mxu0 0.0
    %785 = vmatprep.subr.mxu0 0.0
    %786 = vmatpush1.msra.mxu0 0.0
    %787 = vmatprep.subr.mxu0 0.0
    %788 = vmatpush1.msra.mxu0 0.0
    %789 = vmatprep.subr.mxu0 0.0
    %790 = vmatpush1.msra.mxu0 0.0
    %791 = vmatprep.subr.mxu0 0.0
    %792 = vmatpush1.msra.mxu0 0.0
    %793 = vmatprep.subr.mxu0 0.0
    %794 = vmatpush1.msra.mxu0 0.0
    %795 = vmatprep.subr.mxu0 0.0
    %796 = vmatpush1.msra.mxu0 0.0
    %797 = vmatprep.subr.mxu0 0.0
    %798 = vmatpush1.msra.mxu0 0.0
    %799 = vmatprep.subr.mxu0 0.0
    %800 = vmatpush1.msra.mxu0 0.0
    %801 = vmatprep.subr.mxu0 0.0
    %802 = vmatpush1.msra.mxu0 0.0
    %803 = vmatprep.mubr.f32.mxu0 0.0
    %804 = vmatmul.mubr.f32.gmra.mrb[0].mxu0 %v662
    %v805 = vpop.f32.mrb[0].mxu0
    %v806 = vadd.f32 0.0, %v805
    %v807 = vpop.f32.mrb[0].mxu0
    %v808 = vadd.f32 0.0, %v807
    %809 = vdwg.mxu0
    %v810 = vadd.f32 %v664, %v735
    %v811 = vadd.f32 %v665, %v737
    %v812 = vadd.f32 %v666, %v806
    %v813 = vadd.f32 %v667, %v808
    %v814 = vmul.f32 %v810, 0.5
    %v815 = vtanh.pop %v814
    %v816 = vmul.f32 %v815, 0.5
    %v817 = vadd.f32 %v816, 0.5
    %v818 = vmul.f32 %v811, 0.5
    %v819 = vtanh.pop %v818
    %v820 = vmul.f32 %v819, 0.5
    %v821 = vadd.f32 %v820, 0.5
    %v822 = vtanh.pop %v812
    %v823 = vmul.f32 %v813, 0.5
    %v824 = vtanh.pop %v823
    %v825 = vmul.f32 %v824, 0.5
    %v826 = vadd.f32 %v825, 0.5
    %v827 = vmul.f32 %v821, %v660
    %v828 = vmul.f32 %v817, %v822
    %v829 = vadd.f32 %v827, %v828
    %v830 = vtanh.pop %v829
    %v831 = vmul.f32 %v826, %v830
    %s832 = scalar_lea.vmem [#allocation2], 64
    %v833 = vld [vmem:[%s832] sm:$0xff]
    %v834 = vld [vmem:[%s832 + $0x8] sm:$0xff]
    %v835 = vld [vmem:[%s832 + $0x10] sm:$0xff]
    %v836 = vld [vmem:[%s832 + $0x18] sm:$0xff]
    %837 = vmatprep.subr.mxu0 %v436
    %838 = vmatpush1.msra.mxu0 %v435
    %839 = vmatprep.subr.mxu0 %v440
    %840 = vmatpush1.msra.mxu0 %v439
    %841 = vmatprep.subr.mxu0 %v444
    %842 = vmatpush1.msra.mxu0 %v443
    %843 = vmatprep.subr.mxu0 %v448
    %844 = vmatpush1.msra.mxu0 %v447
    %845 = vmatprep.subr.mxu0 %v452
    %846 = vmatpush1.msra.mxu0 %v451
    %847 = vmatprep.subr.mxu0 %v456
    %848 = vmatpush1.msra.mxu0 %v455
    %849 = vmatprep.subr.mxu0 %v460
    %850 = vmatpush1.msra.mxu0 %v459
    %851 = vmatprep.subr.mxu0 %v464
    %852 = vmatpush1.msra.mxu0 %v463
    %853 = vmatprep.subr.mxu0 %v468
    %854 = vmatpush1.msra.mxu0 %v467
    %855 = vmatprep.subr.mxu0 %v472
    %856 = vmatpush1.msra.mxu0 %v471
    %857 = vmatprep.subr.mxu0 %v476
    %858 = vmatpush1.msra.mxu0 %v475
    %859 = vmatprep.subr.mxu0 %v480
    %860 = vmatpush1.msra.mxu0 %v479
    %861 = vmatprep.subr.mxu0 %v484
    %862 = vmatpush1.msra.mxu0 %v483
    %863 = vmatprep.subr.mxu0 %v488
    %864 = vmatpush1.msra.mxu0 %v487
    %865 = vmatprep.subr.mxu0 %v492
    %866 = vmatpush1.msra.mxu0 %v491
    %867 = vmatprep.subr.mxu0 %v496
    %868 = vmatpush1.msra.mxu0 %v495
    %869 = vmatprep.subr.mxu0 0.0
    %870 = vmatpush1.msra.mxu0 0.0
    %871 = vmatprep.subr.mxu0 0.0
    %872 = vmatpush1.msra.mxu0 0.0
    %873 = vmatprep.subr.mxu0 0.0
    %874 = vmatpush1.msra.mxu0 0.0
    %875 = vmatprep.subr.mxu0 0.0
    %876 = vmatpush1.msra.mxu0 0.0
    %877 = vmatprep.subr.mxu0 0.0
    %878 = vmatpush1.msra.mxu0 0.0
    %879 = vmatprep.subr.mxu0 0.0
    %880 = vmatpush1.msra.mxu0 0.0
    %881 = vmatprep.subr.mxu0 0.0
    %882 = vmatpush1.msra.mxu0 0.0
    %883 = vmatprep.subr.mxu0 0.0
    %884 = vmatpush1.msra.mxu0 0.0
    %885 = vmatprep.subr.mxu0 0.0
    %886 = vmatpush1.msra.mxu0 0.0
    %887 = vmatprep.subr.mxu0 0.0
    %888 = vmatpush1.msra.mxu0 0.0
    %889 = vmatprep.subr.mxu0 0.0
    %890 = vmatpush1.msra.mxu0 0.0
    %891 = vmatprep.subr.mxu0 0.0
    %892 = vmatpush1.msra.mxu0 0.0
    %893 = vmatprep.subr.mxu0 0.0
    %894 = vmatpush1.msra.mxu0 0.0
    %895 = vmatprep.subr.mxu0 0.0
    %896 = vmatpush1.msra.mxu0 0.0
    %897 = vmatprep.subr.mxu0 0.0
    %898 = vmatpush1.msra.mxu0 0.0
    %899 = vmatprep.subr.mxu0 0.0
    %900 = vmatpush1.msra.mxu0 0.0
    %901 = vmatprep.mubr.f32.mxu0 0.0
    %902 = vmatmul.mubr.f32.gmra.mrb[0].mxu0 %v831
    %v903 = vpop.f32.mrb[0].mxu0
    %v904 = vadd.f32 0.0, %v903
    %v905 = vpop.f32.mrb[0].mxu0
    %v906 = vadd.f32 0.0, %v905
    %907 = vdwg.mxu0
    %908 = vmatprep.subr.mxu0 %v438
    %909 = vmatpush1.msra.mxu0 %v437
    %910 = vmatprep.subr.mxu0 %v442
    %911 = vmatpush1.msra.mxu0 %v441
    %912 = vmatprep.subr.mxu0 %v446
    %913 = vmatpush1.msra.mxu0 %v445
    %914 = vmatprep.subr.mxu0 %v450
    %915 = vmatpush1.msra.mxu0 %v449
    %916 = vmatprep.subr.mxu0 %v454
    %917 = vmatpush1.msra.mxu0 %v453
    %918 = vmatprep.subr.mxu0 %v458
    %919 = vmatpush1.msra.mxu0 %v457
    %920 = vmatprep.subr.mxu0 %v462
    %921 = vmatpush1.msra.mxu0 %v461
    %922 = vmatprep.subr.mxu0 %v466
    %923 = vmatpush1.msra.mxu0 %v465
    %924 = vmatprep.subr.mxu0 %v470
    %925 = vmatpush1.msra.mxu0 %v469
    %926 = vmatprep.subr.mxu0 %v474
    %927 = vmatpush1.msra.mxu0 %v473
    %928 = vmatprep.subr.mxu0 %v478
    %929 = vmatpush1.msra.mxu0 %v477
    %930 = vmatprep.subr.mxu0 %v482
    %931 = vmatpush1.msra.mxu0 %v481
    %932 = vmatprep.subr.mxu0 %v486
    %933 = vmatpush1.msra.mxu0 %v485
    %934 = vmatprep.subr.mxu0 %v490
    %935 = vmatpush1.msra.mxu0 %v489
    %936 = vmatprep.subr.mxu0 %v494
    %937 = vmatpush1.msra.mxu0 %v493
    %938 = vmatprep.subr.mxu0 %v498
    %939 = vmatpush1.msra.mxu0 %v497
    %940 = vmatprep.subr.mxu0 0.0
    %941 = vmatpush1.msra.mxu0 0.0
    %942 = vmatprep.subr.mxu0 0.0
    %943 = vmatpush1.msra.mxu0 0.0
    %944 = vmatprep.subr.mxu0 0.0
    %945 = vmatpush1.msra.mxu0 0.0
    %946 = vmatprep.subr.mxu0 0.0
    %947 = vmatpush1.msra.mxu0 0.0
    %948 = vmatprep.subr.mxu0 0.0
    %949 = vmatpush1.msra.mxu0 0.0
    %950 = vmatprep.subr.mxu0 0.0
    %951 = vmatpush1.msra.mxu0 0.0
    %952 = vmatprep.subr.mxu0 0.0
    %953 = vmatpush1.msra.mxu0 0.0
    %954 = vmatprep.subr.mxu0 0.0
    %955 = vmatpush1.msra.mxu0 0.0
    %956 = vmatprep.subr.mxu0 0.0
    %957 = vmatpush1.msra.mxu0 0.0
    %958 = vmatprep.subr.mxu0 0.0
    %959 = vmatpush1.msra.mxu0 0.0
    %960 = vmatprep.subr.mxu0 0.0
    %961 = vmatpush1.msra.mxu0 0.0
    %962 = vmatprep.subr.mxu0 0.0
    %963 = vmatpush1.msra.mxu0 0.0
    %964 = vmatprep.subr.mxu0 0.0
    %965 = vmatpush1.msra.mxu0 0.0
    %966 = vmatprep.subr.mxu0 0.0
    %967 = vmatpush1.msra.mxu0 0.0
    %968 = vmatprep.subr.mxu0 0.0
    %969 = vmatpush1.msra.mxu0 0.0
    %970 = vmatprep.subr.mxu0 0.0
    %971 = vmatpush1.msra.mxu0 0.0
    %972 = vmatprep.mubr.f32.mxu0 0.0
    %973 = vmatmul.mubr.f32.gmra.mrb[0].mxu0 %v831
    %v974 = vpop.f32.mrb[0].mxu0
    %v975 = vadd.f32 0.0, %v974
    %v976 = vpop.f32.mrb[0].mxu0
    %v977 = vadd.f32 0.0, %v976
    %978 = vdwg.mxu0
    %v979 = vadd.f32 %v833, %v904
    %v980 = vadd.f32 %v834, %v906
    %v981 = vadd.f32 %v835, %v975
    %v982 = vadd.f32 %v836, %v977
    %v983 = vmul.f32 %v979, 0.5
    %v984 = vtanh.pop %v983
    %v985 = vmul.f32 %v984, 0.5
    %v986 = vadd.f32 %v985, 0.5
    %v987 = vmul.f32 %v980, 0.5
    %v988 = vtanh.pop %v987
    %v989 = vmul.f32 %v988, 0.5
    %v990 = vadd.f32 %v989, 0.5
    %v991 = vtanh.pop %v981
    %v992 = vmul.f32 %v982, 0.5
    %v993 = vtanh.pop %v992
    %v994 = vmul.f32 %v993, 0.5
    %v995 = vadd.f32 %v994, 0.5
    %v996 = vmul.f32 %v990, %v829
    %v997 = vmul.f32 %v986, %v991
    %v998 = vadd.f32 %v996, %v997
    %v999 = vtanh.pop %v998
    %v1000 = vmul.f32 %v995, %v999
    %s1001 = scalar_lea.vmem [#allocation2], 96
    %v1002 = vld [vmem:[%s1001] sm:$0xff]
    %v1003 = vld [vmem:[%s1001 + $0x8] sm:$0xff]
    %v1004 = vld [vmem:[%s1001 + $0x10] sm:$0xff]
    %v1005 = vld [vmem:[%s1001 + $0x18] sm:$0xff]
    %1006 = vmatprep.subr.mxu0 %v436
    %1007 = vmatpush1.msra.mxu0 %v435
    %1008 = vmatprep.subr.mxu0 %v440
    %1009 = vmatpush1.msra.mxu0 %v439
    %1010 = vmatprep.subr.mxu0 %v444
    %1011 = vmatpush1.msra.mxu0 %v443
    %1012 = vmatprep.subr.mxu0 %v448
    %1013 = vmatpush1.msra.mxu0 %v447
    %1014 = vmatprep.subr.mxu0 %v452
    %1015 = vmatpush1.msra.mxu0 %v451
    %1016 = vmatprep.subr.mxu0 %v456
    %1017 = vmatpush1.msra.mxu0 %v455
    %1018 = vmatprep.subr.mxu0 %v460
    %1019 = vmatpush1.msra.mxu0 %v459
    %1020 = vmatprep.subr.mxu0 %v464
    %1021 = vmatpush1.msra.mxu0 %v463
    %1022 = vmatprep.subr.mxu0 %v468
    %1023 = vmatpush1.msra.mxu0 %v467
    %1024 = vmatprep.subr.mxu0 %v472
    %1025 = vmatpush1.msra.mxu0 %v471
    %1026 = vmatprep.subr.mxu0 %v476
    %1027 = vmatpush1.msra.mxu0 %v475
    %1028 = vmatprep.subr.mxu0 %v480
    %1029 = vmatpush1.msra.mxu0 %v479
    %1030 = vmatprep.subr.mxu0 %v484
    %1031 = vmatpush1.msra.mxu0 %v483
    %1032 = vmatprep.subr.mxu0 %v488
    %1033 = vmatpush1.msra.mxu0 %v487
    %1034 = vmatprep.subr.mxu0 %v492
    %1035 = vmatpush1.msra.mxu0 %v491
    %1036 = vmatprep.subr.mxu0 %v496
    %1037 = vmatpush1.msra.mxu0 %v495
    %1038 = vmatprep.subr.mxu0 0.0
    %1039 = vmatpush1.msra.mxu0 0.0
    %1040 = vmatprep.subr.mxu0 0.0
    %1041 = vmatpush1.msra.mxu0 0.0
    %1042 = vmatprep.subr.mxu0 0.0
    %1043 = vmatpush1.msra.mxu0 0.0
    %1044 = vmatprep.subr.mxu0 0.0
    %1045 = vmatpush1.msra.mxu0 0.0
    %1046 = vmatprep.subr.mxu0 0.0
    %1047 = vmatpush1.msra.mxu0 0.0
    %1048 = vmatprep.subr.mxu0 0.0
    %1049 = vmatpush1.msra.mxu0 0.0
    %1050 = vmatprep.subr.mxu0 0.0
    %1051 = vmatpush1.msra.mxu0 0.0
    %1052 = vmatprep.subr.mxu0 0.0
    %1053 = vmatpush1.msra.mxu0 0.0
    %1054 = vmatprep.subr.mxu0 0.0
    %1055 = vmatpush1.msra.mxu0 0.0
    %1056 = vmatprep.subr.mxu0 0.0
    %1057 = vmatpush1.msra.mxu0 0.0
    %1058 = vmatprep.subr.mxu0 0.0
    %1059 = vmatpush1.msra.mxu0 0.0
    %1060 = vmatprep.subr.mxu0 0.0
    %1061 = vmatpush1.msra.mxu0 0.0
    %1062 = vmatprep.subr.mxu0 0.0
    %1063 = vmatpush1.msra.mxu0 0.0
    %1064 = vmatprep.subr.mxu0 0.0
    %1065 = vmatpush1.msra.mxu0 0.0
    %1066 = vmatprep.subr.mxu0 0.0
    %1067 = vmatpush1.msra.mxu0 0.0
    %1068 = vmatprep.subr.mxu0 0.0
    %1069 = vmatpush1.msra.mxu0 0.0
    %1070 = vmatprep.mubr.f32.mxu0 0.0
    %1071 = vmatmul.mubr.f32.gmra.mrb[0].mxu0 %v1000
    %v1072 = vpop.f32.mrb[0].mxu0
    %v1073 = vadd.f32 0.0, %v1072
    %v1074 = vpop.f32.mrb[0].mxu0
    %v1075 = vadd.f32 0.0, %v1074
    %1076 = vdwg.mxu0
    %1077 = vmatprep.subr.mxu0 %v438
    %1078 = vmatpush1.msra.mxu0 %v437
    %1079 = vmatprep.subr.mxu0 %v442
    %1080 = vmatpush1.msra.mxu0 %v441
    %1081 = vmatprep.subr.mxu0 %v446
    %1082 = vmatpush1.msra.mxu0 %v445
    %1083 = vmatprep.subr.mxu0 %v450
    %1084 = vmatpush1.msra.mxu0 %v449
    %1085 = vmatprep.subr.mxu0 %v454
    %1086 = vmatpush1.msra.mxu0 %v453
    %1087 = vmatprep.subr.mxu0 %v458
    %1088 = vmatpush1.msra.mxu0 %v457
    %1089 = vmatprep.subr.mxu0 %v462
    %1090 = vmatpush1.msra.mxu0 %v461
    %1091 = vmatprep.subr.mxu0 %v466
    %1092 = vmatpush1.msra.mxu0 %v465
    %1093 = vmatprep.subr.mxu0 %v470
    %1094 = vmatpush1.msra.mxu0 %v469
    %1095 = vmatprep.subr.mxu0 %v474
    %1096 = vmatpush1.msra.mxu0 %v473
    %1097 = vmatprep.subr.mxu0 %v478
    %1098 = vmatpush1.msra.mxu0 %v477
    %1099 = vmatprep.subr.mxu0 %v482
    %1100 = vmatpush1.msra.mxu0 %v481
    %1101 = vmatprep.subr.mxu0 %v486
    %1102 = vmatpush1.msra.mxu0 %v485
    %1103 = vmatprep.subr.mxu0 %v490
    %1104 = vmatpush1.msra.mxu0 %v489
    %1105 = vmatprep.subr.mxu0 %v494
    %1106 = vmatpush1.msra.mxu0 %v493
    %1107 = vmatprep.subr.mxu0 %v498
    %1108 = vmatpush1.msra.mxu0 %v497
    %1109 = vmatprep.subr.mxu0 0.0
    %1110 = vmatpush1.msra.mxu0 0.0
    %1111 = vmatprep.subr.mxu0 0.0
    %1112 = vmatpush1.msra.mxu0 0.0
    %1113 = vmatprep.subr.mxu0 0.0
    %1114 = vmatpush1.msra.mxu0 0.0
    %1115 = vmatprep.subr.mxu0 0.0
    %1116 = vmatpush1.msra.mxu0 0.0
    %1117 = vmatprep.subr.mxu0 0.0
    %1118 = vmatpush1.msra.mxu0 0.0
    %1119 = vmatprep.subr.mxu0 0.0
    %1120 = vmatpush1.msra.mxu0 0.0
    %1121 = vmatprep.subr.mxu0 0.0
    %1122 = vmatpush1.msra.mxu0 0.0
    %1123 = vmatprep.subr.mxu0 0.0
    %1124 = vmatpush1.msra.mxu0 0.0
    %1125 = vmatprep.subr.mxu0 0.0
    %1126 = vmatpush1.msra.mxu0 0.0
    %1127 = vmatprep.subr.mxu0 0.0
    %1128 = vmatpush1.msra.mxu0 0.0
    %1129 = vmatprep.subr.mxu0 0.0
    %1130 = vmatpush1.msra.mxu0 0.0
    %1131 = vmatprep.subr.mxu0 0.0
    %1132 = vmatpush1.msra.mxu0 0.0
    %1133 = vmatprep.subr.mxu0 0.0
    %1134 = vmatpush1.msra.mxu0 0.0
    %1135 = vmatprep.subr.mxu0 0.0
    %1136 = vmatpush1.msra.mxu0 0.0
    %1137 = vmatprep.subr.mxu0 0.0
    %1138 = vmatpush1.msra.mxu0 0.0
    %1139 = vmatprep.subr.mxu0 0.0
    %1140 = vmatpush1.msra.mxu0 0.0
    %1141 = vmatprep.mubr.f32.mxu0 0.0
    %1142 = vmatmul.mubr.f32.gmra.mrb[0].mxu0 %v1000
    %v1143 = vpop.f32.mrb[0].mxu0
    %v1144 = vadd.f32 0.0, %v1143
    %v1145 = vpop.f32.mrb[0].mxu0
    %v1146 = vadd.f32 0.0, %v1145
    %1147 = vdwg.mxu0
    %v1148 = vadd.f32 %v1002, %v1073
    %v1149 = vadd.f32 %v1003, %v1075
    %v1150 = vadd.f32 %v1004, %v1144
    %v1151 = vadd.f32 %v1005, %v1146
    %v1152 = vmul.f32 %v1148, 0.5
    %v1153 = vtanh.pop %v1152
    %v1154 = vmul.f32 %v1153, 0.5
    %v1155 = vadd.f32 %v1154, 0.5
    %v1156 = vmul.f32 %v1149, 0.5
    %v1157 = vtanh.pop %v1156
    %v1158 = vmul.f32 %v1157, 0.5
    %v1159 = vadd.f32 %v1158, 0.5
    %v1160 = vtanh.pop %v1150
    %v1161 = vmul.f32 %v1151, 0.5
    %v1162 = vtanh.pop %v1161
    %v1163 = vmul.f32 %v1162, 0.5
    %v1164 = vadd.f32 %v1163, 0.5
    %v1165 = vmul.f32 %v1159, %v998
    %v1166 = vmul.f32 %v1155, %v1160
    %v1167 = vadd.f32 %v1165, %v1166
    %v1168 = vtanh.pop %v1167
    %v1169 = vmul.f32 %v1164, %v1168
    %s1170 = scalar_lea.vmem [#allocation2], 128
    %v1171 = vld [vmem:[%s1170] sm:$0xff]
    %v1172 = vld [vmem:[%s1170 + $0x8] sm:$0xff]
    %v1173 = vld [vmem:[%s1170 + $0x10] sm:$0xff]
    %v1174 = vld [vmem:[%s1170 + $0x18] sm:$0xff]
    %1175 = vmatprep.subr.mxu0 %v436
    %1176 = vmatpush1.msra.mxu0 %v435
    %1177 = vmatprep.subr.mxu0 %v440
    %1178 = vmatpush1.msra.mxu0 %v439
    %1179 = vmatprep.subr.mxu0 %v444
    %1180 = vmatpush1.msra.mxu0 %v443
    %1181 = vmatprep.subr.mxu0 %v448
    %1182 = vmatpush1.msra.mxu0 %v447
    %1183 = vmatprep.subr.mxu0 %v452
    %1184 = vmatpush1.msra.mxu0 %v451
    %1185 = vmatprep.subr.mxu0 %v456
    %1186 = vmatpush1.msra.mxu0 %v455
    %1187 = vmatprep.subr.mxu0 %v460
    %1188 = vmatpush1.msra.mxu0 %v459
    %1189 = vmatprep.subr.mxu0 %v464
    %1190 = vmatpush1.msra.mxu0 %v463
    %1191 = vmatprep.subr.mxu0 %v468
    %1192 = vmatpush1.msra.mxu0 %v467
    %1193 = vmatprep.subr.mxu0 %v472
    %1194 = vmatpush1.msra.mxu0 %v471
    %1195 = vmatprep.subr.mxu0 %v476
    %1196 = vmatpush1.msra.mxu0 %v475
    %1197 = vmatprep.subr.mxu0 %v480
    %1198 = vmatpush1.msra.mxu0 %v479
    %1199 = vmatprep.subr.mxu0 %v484
    %1200 = vmatpush1.msra.mxu0 %v483
    %1201 = vmatprep.subr.mxu0 %v488
    %1202 = vmatpush1.msra.mxu0 %v487
    %1203 = vmatprep.subr.mxu0 %v492
    %1204 = vmatpush1.msra.mxu0 %v491
    %1205 = vmatprep.subr.mxu0 %v496
    %1206 = vmatpush1.msra.mxu0 %v495
    %1207 = vmatprep.subr.mxu0 0.0
    %1208 = vmatpush1.msra.mxu0 0.0
    %1209 = vmatprep.subr.mxu0 0.0
    %1210 = vmatpush1.msra.mxu0 0.0
    %1211 = vmatprep.subr.mxu0 0.0
    %1212 = vmatpush1.msra.mxu0 0.0
    %1213 = vmatprep.subr.mxu0 0.0
    %1214 = vmatpush1.msra.mxu0 0.0
    %1215 = vmatprep.subr.mxu0 0.0
    %1216 = vmatpush1.msra.mxu0 0.0
    %1217 = vmatprep.subr.mxu0 0.0
    %1218 = vmatpush1.msra.mxu0 0.0
    %1219 = vmatprep.subr.mxu0 0.0
    %1220 = vmatpush1.msra.mxu0 0.0
    %1221 = vmatprep.subr.mxu0 0.0
    %1222 = vmatpush1.msra.mxu0 0.0
    %1223 = vmatprep.subr.mxu0 0.0
    %1224 = vmatpush1.msra.mxu0 0.0
    %1225 = vmatprep.subr.mxu0 0.0
    %1226 = vmatpush1.msra.mxu0 0.0
    %1227 = vmatprep.subr.mxu0 0.0
    %1228 = vmatpush1.msra.mxu0 0.0
    %1229 = vmatprep.subr.mxu0 0.0
    %1230 = vmatpush1.msra.mxu0 0.0
    %1231 = vmatprep.subr.mxu0 0.0
    %1232 = vmatpush1.msra.mxu0 0.0
    %1233 = vmatprep.subr.mxu0 0.0
    %1234 = vmatpush1.msra.mxu0 0.0
    %1235 = vmatprep.subr.mxu0 0.0
    %1236 = vmatpush1.msra.mxu0 0.0
    %1237 = vmatprep.subr.mxu0 0.0
    %1238 = vmatpush1.msra.mxu0 0.0
    %1239 = vmatprep.mubr.f32.mxu0 0.0
    %1240 = vmatmul.mubr.f32.gmra.mrb[0].mxu0 %v1169
    %v1241 = vpop.f32.mrb[0].mxu0
    %v1242 = vadd.f32 0.0, %v1241
    %v1243 = vpop.f32.mrb[0].mxu0
    %v1244 = vadd.f32 0.0, %v1243
    %1245 = vdwg.mxu0
    %1246 = vmatprep.subr.mxu0 %v438
    %1247 = vmatpush1.msra.mxu0 %v437
    %1248 = vmatprep.subr.mxu0 %v442
    %1249 = vmatpush1.msra.mxu0 %v441
    %1250 = vmatprep.subr.mxu0 %v446
    %1251 = vmatpush1.msra.mxu0 %v445
    %1252 = vmatprep.subr.mxu0 %v450
    %1253 = vmatpush1.msra.mxu0 %v449
    %1254 = vmatprep.subr.mxu0 %v454
    %1255 = vmatpush1.msra.mxu0 %v453
    %1256 = vmatprep.subr.mxu0 %v458
    %1257 = vmatpush1.msra.mxu0 %v457
    %1258 = vmatprep.subr.mxu0 %v462
    %1259 = vmatpush1.msra.mxu0 %v461
    %1260 = vmatprep.subr.mxu0 %v466
    %1261 = vmatpush1.msra.mxu0 %v465
    %1262 = vmatprep.subr.mxu0 %v470
    %1263 = vmatpush1.msra.mxu0 %v469
    %1264 = vmatprep.subr.mxu0 %v474
    %1265 = vmatpush1.msra.mxu0 %v473
    %1266 = vmatprep.subr.mxu0 %v478
    %1267 = vmatpush1.msra.mxu0 %v477
    %1268 = vmatprep.subr.mxu0 %v482
    %1269 = vmatpush1.msra.mxu0 %v481
    %1270 = vmatprep.subr.mxu0 %v486
    %1271 = vmatpush1.msra.mxu0 %v485
    %1272 = vmatprep.subr.mxu0 %v490
    %1273 = vmatpush1.msra.mxu0 %v489
    %1274 = vmatprep.subr.mxu0 %v494
    %1275 = vmatpush1.msra.mxu0 %v493
    %1276 = vmatprep.subr.mxu0 %v498
    %1277 = vmatpush1.msra.mxu0 %v497
    %1278 = vmatprep.subr.mxu0 0.0
    %1279 = vmatpush1.msra.mxu0 0.0
    %1280 = vmatprep.subr.mxu0 0.0
    %1281 = vmatpush1.msra.mxu0 0.0
    %1282 = vmatprep.subr.mxu0 0.0
    %1283 = vmatpush1.msra.mxu0 0.0
    %1284 = vmatprep.subr.mxu0 0.0
    %1285 = vmatpush1.msra.mxu0 0.0
    %1286 = vmatprep.subr.mxu0 0.0
    %1287 = vmatpush1.msra.mxu0 0.0
    %1288 = vmatprep.subr.mxu0 0.0
    %1289 = vmatpush1.msra.mxu0 0.0
    %1290 = vmatprep.subr.mxu0 0.0
    %1291 = vmatpush1.msra.mxu0 0.0
    %1292 = vmatprep.subr.mxu0 0.0
    %1293 = vmatpush1.msra.mxu0 0.0
    %1294 = vmatprep.subr.mxu0 0.0
    %1295 = vmatpush1.msra.mxu0 0.0
    %1296 = vmatprep.subr.mxu0 0.0
    %1297 = vmatpush1.msra.mxu0 0.0
    %1298 = vmatprep.subr.mxu0 0.0
    %1299 = vmatpush1.msra.mxu0 0.0
    %1300 = vmatprep.subr.mxu0 0.0
    %1301 = vmatpush1.msra.mxu0 0.0
    %1302 = vmatprep.subr.mxu0 0.0
    %1303 = vmatpush1.msra.mxu0 0.0
    %1304 = vmatprep.subr.mxu0 0.0
    %1305 = vmatpush1.msra.mxu0 0.0
    %1306 = vmatprep.subr.mxu0 0.0
    %1307 = vmatpush1.msra.mxu0 0.0
    %1308 = vmatprep.subr.mxu0 0.0
    %1309 = vmatpush1.msra.mxu0 0.0
    %1310 = vmatprep.mubr.f32.mxu0 0.0
    %1311 = vmatmul.mubr.f32.gmra.mrb[0].mxu0 %v1169
    %v1312 = vpop.f32.mrb[0].mxu0
    %v1313 = vadd.f32 0.0, %v1312
    %v1314 = vpop.f32.mrb[0].mxu0
    %v1315 = vadd.f32 0.0, %v1314
    %1316 = vdwg.mxu0
    %v1317 = vadd.f32 %v1171, %v1242
    %v1318 = vadd.f32 %v1172, %v1244
    %v1319 = vadd.f32 %v1173, %v1313
    %v1320 = vadd.f32 %v1174, %v1315
    %v1321 = vmul.f32 %v1317, 0.5
    %v1322 = vtanh.pop %v1321
    %v1323 = vmul.f32 %v1322, 0.5
    %v1324 = vadd.f32 %v1323, 0.5
    %v1325 = vmul.f32 %v1318, 0.5
    %v1326 = vtanh.pop %v1325
    %v1327 = vmul.f32 %v1326, 0.5
    %v1328 = vadd.f32 %v1327, 0.5
    %v1329 = vtanh.pop %v1319
    %v1330 = vmul.f32 %v1320, 0.5
    %v1331 = vtanh.pop %v1330
    %v1332 = vmul.f32 %v1331, 0.5
    %v1333 = vadd.f32 %v1332, 0.5
    %v1334 = vmul.f32 %v1328, %v1167
    %v1335 = vmul.f32 %v1324, %v1329
    %v1336 = vadd.f32 %v1334, %v1335
    %v1337 = vtanh.pop %v1336
    %v1338 = vmul.f32 %v1333, %v1337
    %s1339 = scalar_lea.vmem [#allocation2], 160
    %v1340 = vld [vmem:[%s1339] sm:$0xff]
    %v1341 = vld [vmem:[%s1339 + $0x8] sm:$0xff]
    %v1342 = vld [vmem:[%s1339 + $0x10] sm:$0xff]
    %v1343 = vld [vmem:[%s1339 + $0x18] sm:$0xff]
    %1344 = vmatprep.subr.mxu0 %v436
    %1345 = vmatpush1.msra.mxu0 %v435
    %1346 = vmatprep.subr.mxu0 %v440
    %1347 = vmatpush1.msra.mxu0 %v439
    %1348 = vmatprep.subr.mxu0 %v444
    %1349 = vmatpush1.msra.mxu0 %v443
    %1350 = vmatprep.subr.mxu0 %v448
    %1351 = vmatpush1.msra.mxu0 %v447
    %1352 = vmatprep.subr.mxu0 %v452
    %1353 = vmatpush1.msra.mxu0 %v451
    %1354 = vmatprep.subr.mxu0 %v456
    %1355 = vmatpush1.msra.mxu0 %v455
    %1356 = vmatprep.subr.mxu0 %v460
    %1357 = vmatpush1.msra.mxu0 %v459
    %1358 = vmatprep.subr.mxu0 %v464
    %1359 = vmatpush1.msra.mxu0 %v463
    %1360 = vmatprep.subr.mxu0 %v468
    %1361 = vmatpush1.msra.mxu0 %v467
    %1362 = vmatprep.subr.mxu0 %v472
    %1363 = vmatpush1.msra.mxu0 %v471
    %1364 = vmatprep.subr.mxu0 %v476
    %1365 = vmatpush1.msra.mxu0 %v475
    %1366 = vmatprep.subr.mxu0 %v480
    %1367 = vmatpush1.msra.mxu0 %v479
    %1368 = vmatprep.subr.mxu0 %v484
    %1369 = vmatpush1.msra.mxu0 %v483
    %1370 = vmatprep.subr.mxu0 %v488
    %1371 = vmatpush1.msra.mxu0 %v487
    %1372 = vmatprep.subr.mxu0 %v492
    %1373 = vmatpush1.msra.mxu0 %v491
    %1374 = vmatprep.subr.mxu0 %v496
    %1375 = vmatpush1.msra.mxu0 %v495
    %1376 = vmatprep.subr.mxu0 0.0
    %1377 = vmatpush1.msra.mxu0 0.0
    %1378 = vmatprep.subr.mxu0 0.0
    %1379 = vmatpush1.msra.mxu0 0.0
    %1380 = vmatprep.subr.mxu0 0.0
    %1381 = vmatpush1.msra.mxu0 0.0
    %1382 = vmatprep.subr.mxu0 0.0
    %1383 = vmatpush1.msra.mxu0 0.0
    %1384 = vmatprep.subr.mxu0 0.0
    %1385 = vmatpush1.msra.mxu0 0.0
    %1386 = vmatprep.subr.mxu0 0.0
    %1387 = vmatpush1.msra.mxu0 0.0
    %1388 = vmatprep.subr.mxu0 0.0
    %1389 = vmatpush1.msra.mxu0 0.0
    %1390 = vmatprep.subr.mxu0 0.0
    %1391 = vmatpush1.msra.mxu0 0.0
    %1392 = vmatprep.subr.mxu0 0.0
    %1393 = vmatpush1.msra.mxu0 0.0
    %1394 = vmatprep.subr.mxu0 0.0
    %1395 = vmatpush1.msra.mxu0 0.0
    %1396 = vmatprep.subr.mxu0 0.0
    %1397 = vmatpush1.msra.mxu0 0.0
    %1398 = vmatprep.subr.mxu0 0.0
    %1399 = vmatpush1.msra.mxu0 0.0
    %1400 = vmatprep.subr.mxu0 0.0
    %1401 = vmatpush1.msra.mxu0 0.0
    %1402 = vmatprep.subr.mxu0 0.0
    %1403 = vmatpush1.msra.mxu0 0.0
    %1404 = vmatprep.subr.mxu0 0.0
    %1405 = vmatpush1.msra.mxu0 0.0
    %1406 = vmatprep.subr.mxu0 0.0
    %1407 = vmatpush1.msra.mxu0 0.0
    %1408 = vmatprep.mubr.f32.mxu0 0.0
    %1409 = vmatmul.mubr.f32.gmra.mrb[0].mxu0 %v1338
    %v1410 = vpop.f32.mrb[0].mxu0
    %v1411 = vadd.f32 0.0, %v1410
    %v1412 = vpop.f32.mrb[0].mxu0
    %v1413 = vadd.f32 0.0, %v1412
    %1414 = vdwg.mxu0
    %1415 = vmatprep.subr.mxu0 %v438
    %1416 = vmatpush1.msra.mxu0 %v437
    %1417 = vmatprep.subr.mxu0 %v442
    %1418 = vmatpush1.msra.mxu0 %v441
    %1419 = vmatprep.subr.mxu0 %v446
    %1420 = vmatpush1.msra.mxu0 %v445
    %1421 = vmatprep.subr.mxu0 %v450
    %1422 = vmatpush1.msra.mxu0 %v449
    %1423 = vmatprep.subr.mxu0 %v454
    %1424 = vmatpush1.msra.mxu0 %v453
    %1425 = vmatprep.subr.mxu0 %v458
    %1426 = vmatpush1.msra.mxu0 %v457
    %1427 = vmatprep.subr.mxu0 %v462
    %1428 = vmatpush1.msra.mxu0 %v461
    %1429 = vmatprep.subr.mxu0 %v466
    %1430 = vmatpush1.msra.mxu0 %v465
    %1431 = vmatprep.subr.mxu0 %v470
    %1432 = vmatpush1.msra.mxu0 %v469
    %1433 = vmatprep.subr.mxu0 %v474
    %1434 = vmatpush1.msra.mxu0 %v473
    %1435 = vmatprep.subr.mxu0 %v478
    %1436 = vmatpush1.msra.mxu0 %v477
    %1437 = vmatprep.subr.mxu0 %v482
    %1438 = vmatpush1.msra.mxu0 %v481
    %1439 = vmatprep.subr.mxu0 %v486
    %1440 = vmatpush1.msra.mxu0 %v485
    %1441 = vmatprep.subr.mxu0 %v490
    %1442 = vmatpush1.msra.mxu0 %v489
    %1443 = vmatprep.subr.mxu0 %v494
    %1444 = vmatpush1.msra.mxu0 %v493
    %1445 = vmatprep.subr.mxu0 %v498
    %1446 = vmatpush1.msra.mxu0 %v497
    %1447 = vmatprep.subr.mxu0 0.0
    %1448 = vmatpush1.msra.mxu0 0.0
    %1449 = vmatprep.subr.mxu0 0.0
    %1450 = vmatpush1.msra.mxu0 0.0
    %1451 = vmatprep.subr.mxu0 0.0
    %1452 = vmatpush1.msra.mxu0 0.0
    %1453 = vmatprep.subr.mxu0 0.0
    %1454 = vmatpush1.msra.mxu0 0.0
    %1455 = vmatprep.subr.mxu0 0.0
    %1456 = vmatpush1.msra.mxu0 0.0
    %1457 = vmatprep.subr.mxu0 0.0
    %1458 = vmatpush1.msra.mxu0 0.0
    %1459 = vmatprep.subr.mxu0 0.0
    %1460 = vmatpush1.msra.mxu0 0.0
    %1461 = vmatprep.subr.mxu0 0.0
    %1462 = vmatpush1.msra.mxu0 0.0
    %1463 = vmatprep.subr.mxu0 0.0
    %1464 = vmatpush1.msra.mxu0 0.0
    %1465 = vmatprep.subr.mxu0 0.0
    %1466 = vmatpush1.msra.mxu0 0.0
    %1467 = vmatprep.subr.mxu0 0.0
    %1468 = vmatpush1.msra.mxu0 0.0
    %1469 = vmatprep.subr.mxu0 0.0
    %1470 = vmatpush1.msra.mxu0 0.0
    %1471 = vmatprep.subr.mxu0 0.0
    %1472 = vmatpush1.msra.mxu0 0.0
    %1473 = vmatprep.subr.mxu0 0.0
    %1474 = vmatpush1.msra.mxu0 0.0
    %1475 = vmatprep.subr.mxu0 0.0
    %1476 = vmatpush1.msra.mxu0 0.0
    %1477 = vmatprep.subr.mxu0 0.0
    %1478 = vmatpush1.msra.mxu0 0.0
    %1479 = vmatprep.mubr.f32.mxu0 0.0
    %1480 = vmatmul.mubr.f32.gmra.mrb[0].mxu0 %v1338
    %v1481 = vpop.f32.mrb[0].mxu0
    %v1482 = vadd.f32 0.0, %v1481
    %v1483 = vpop.f32.mrb[0].mxu0
    %v1484 = vadd.f32 0.0, %v1483
    %1485 = vdwg.mxu0
    %v1486 = vadd.f32 %v1340, %v1411
    %v1487 = vadd.f32 %v1341, %v1413
    %v1488 = vadd.f32 %v1342, %v1482
    %v1489 = vadd.f32 %v1343, %v1484
    %v1490 = vmul.f32 %v1486, 0.5
    %v1491 = vtanh.pop %v1490
    %v1492 = vmul.f32 %v1491, 0.5
    %v1493 = vadd.f32 %v1492, 0.5
    %v1494 = vmul.f32 %v1487, 0.5
    %v1495 = vtanh.pop %v1494
    %v1496 = vmul.f32 %v1495, 0.5
    %v1497 = vadd.f32 %v1496, 0.5
    %v1498 = vtanh.pop %v1488
    %v1499 = vmul.f32 %v1489, 0.5
    %v1500 = vtanh.pop %v1499
    %v1501 = vmul.f32 %v1500, 0.5
    %v1502 = vadd.f32 %v1501, 0.5
    %v1503 = vmul.f32 %v1497, %v1336
    %v1504 = vmul.f32 %v1493, %v1498
    %v1505 = vadd.f32 %v1503, %v1504
    %v1506 = vtanh.pop %v1505
    %v1507 = vmul.f32 %v1502, %v1506
    %s1508 = scalar_lea.vmem [#allocation2], 192
    %v1509 = vld [vmem:[%s1508] sm:$0xff]
    %v1510 = vld [vmem:[%s1508 + $0x8] sm:$0xff]
    %v1511 = vld [vmem:[%s1508 + $0x10] sm:$0xff]
    %v1512 = vld [vmem:[%s1508 + $0x18] sm:$0xff]
    %1513 = vmatprep.subr.mxu0 %v436
    %1514 = vmatpush1.msra.mxu0 %v435
    %1515 = vmatprep.subr.mxu0 %v440
    %1516 = vmatpush1.msra.mxu0 %v439
    %1517 = vmatprep.subr.mxu0 %v444
    %1518 = vmatpush1.msra.mxu0 %v443
    %1519 = vmatprep.subr.mxu0 %v448
    %1520 = vmatpush1.msra.mxu0 %v447
    %1521 = vmatprep.subr.mxu0 %v452
    %1522 = vmatpush1.msra.mxu0 %v451
    %1523 = vmatprep.subr.mxu0 %v456
    %1524 = vmatpush1.msra.mxu0 %v455
    %1525 = vmatprep.subr.mxu0 %v460
    %1526 = vmatpush1.msra.mxu0 %v459
    %1527 = vmatprep.subr.mxu0 %v464
    %1528 = vmatpush1.msra.mxu0 %v463
    %1529 = vmatprep.subr.mxu0 %v468
    %1530 = vmatpush1.msra.mxu0 %v467
    %1531 = vmatprep.subr.mxu0 %v472
    %1532 = vmatpush1.msra.mxu0 %v471
    %1533 = vmatprep.subr.mxu0 %v476
    %1534 = vmatpush1.msra.mxu0 %v475
    %1535 = vmatprep.subr.mxu0 %v480
    %1536 = vmatpush1.msra.mxu0 %v479
    %1537 = vmatprep.subr.mxu0 %v484
    %1538 = vmatpush1.msra.mxu0 %v483
    %1539 = vmatprep.subr.mxu0 %v488
    %1540 = vmatpush1.msra.mxu0 %v487
    %1541 = vmatprep.subr.mxu0 %v492
    %1542 = vmatpush1.msra.mxu0 %v491
    %1543 = vmatprep.subr.mxu0 %v496
    %1544 = vmatpush1.msra.mxu0 %v495
    %1545 = vmatprep.subr.mxu0 0.0
    %1546 = vmatpush1.msra.mxu0 0.0
    %1547 = vmatprep.subr.mxu0 0.0
    %1548 = vmatpush1.msra.mxu0 0.0
    %1549 = vmatprep.subr.mxu0 0.0
    %1550 = vmatpush1.msra.mxu0 0.0
    %1551 = vmatprep.subr.mxu0 0.0
    %1552 = vmatpush1.msra.mxu0 0.0
    %1553 = vmatprep.subr.mxu0 0.0
    %1554 = vmatpush1.msra.mxu0 0.0
    %1555 = vmatprep.subr.mxu0 0.0
    %1556 = vmatpush1.msra.mxu0 0.0
    %1557 = vmatprep.subr.mxu0 0.0
    %1558 = vmatpush1.msra.mxu0 0.0
    %1559 = vmatprep.subr.mxu0 0.0
    %1560 = vmatpush1.msra.mxu0 0.0
    %1561 = vmatprep.subr.mxu0 0.0
    %1562 = vmatpush1.msra.mxu0 0.0
    %1563 = vmatprep.subr.mxu0 0.0
    %1564 = vmatpush1.msra.mxu0 0.0
    %1565 = vmatprep.subr.mxu0 0.0
    %1566 = vmatpush1.msra.mxu0 0.0
    %1567 = vmatprep.subr.mxu0 0.0
    %1568 = vmatpush1.msra.mxu0 0.0
    %1569 = vmatprep.subr.mxu0 0.0
    %1570 = vmatpush1.msra.mxu0 0.0
    %1571 = vmatprep.subr.mxu0 0.0
    %1572 = vmatpush1.msra.mxu0 0.0
    %1573 = vmatprep.subr.mxu0 0.0
    %1574 = vmatpush1.msra.mxu0 0.0
    %1575 = vmatprep.subr.mxu0 0.0
    %1576 = vmatpush1.msra.mxu0 0.0
    %1577 = vmatprep.mubr.f32.mxu0 0.0
    %1578 = vmatmul.mubr.f32.gmra.mrb[0].mxu0 %v1507
    %v1579 = vpop.f32.mrb[0].mxu0
    %v1580 = vadd.f32 0.0, %v1579
    %v1581 = vpop.f32.mrb[0].mxu0
    %v1582 = vadd.f32 0.0, %v1581
    %1583 = vdwg.mxu0
    %1584 = vmatprep.subr.mxu0 %v438
    %1585 = vmatpush1.msra.mxu0 %v437
    %1586 = vmatprep.subr.mxu0 %v442
    %1587 = vmatpush1.msra.mxu0 %v441
    %1588 = vmatprep.subr.mxu0 %v446
    %1589 = vmatpush1.msra.mxu0 %v445
    %1590 = vmatprep.subr.mxu0 %v450
    %1591 = vmatpush1.msra.mxu0 %v449
    %1592 = vmatprep.subr.mxu0 %v454
    %1593 = vmatpush1.msra.mxu0 %v453
    %1594 = vmatprep.subr.mxu0 %v458
    %1595 = vmatpush1.msra.mxu0 %v457
    %1596 = vmatprep.subr.mxu0 %v462
    %1597 = vmatpush1.msra.mxu0 %v461
    %1598 = vmatprep.subr.mxu0 %v466
    %1599 = vmatpush1.msra.mxu0 %v465
    %1600 = vmatprep.subr.mxu0 %v470
    %1601 = vmatpush1.msra.mxu0 %v469
    %1602 = vmatprep.subr.mxu0 %v474
    %1603 = vmatpush1.msra.mxu0 %v473
    %1604 = vmatprep.subr.mxu0 %v478
    %1605 = vmatpush1.msra.mxu0 %v477
    %1606 = vmatprep.subr.mxu0 %v482
    %1607 = vmatpush1.msra.mxu0 %v481
    %1608 = vmatprep.subr.mxu0 %v486
    %1609 = vmatpush1.msra.mxu0 %v485
    %1610 = vmatprep.subr.mxu0 %v490
    %1611 = vmatpush1.msra.mxu0 %v489
    %1612 = vmatprep.subr.mxu0 %v494
    %1613 = vmatpush1.msra.mxu0 %v493
    %1614 = vmatprep.subr.mxu0 %v498
    %1615 = vmatpush1.msra.mxu0 %v497
    %1616 = vmatprep.subr.mxu0 0.0
    %1617 = vmatpush1.msra.mxu0 0.0
    %1618 = vmatprep.subr.mxu0 0.0
    %1619 = vmatpush1.msra.mxu0 0.0
    %1620 = vmatprep.subr.mxu0 0.0
    %1621 = vmatpush1.msra.mxu0 0.0
    %1622 = vmatprep.subr.mxu0 0.0
    %1623 = vmatpush1.msra.mxu0 0.0
    %1624 = vmatprep.subr.mxu0 0.0
    %1625 = vmatpush1.msra.mxu0 0.0
    %1626 = vmatprep.subr.mxu0 0.0
    %1627 = vmatpush1.msra.mxu0 0.0
    %1628 = vmatprep.subr.mxu0 0.0
    %1629 = vmatpush1.msra.mxu0 0.0
    %1630 = vmatprep.subr.mxu0 0.0
    %1631 = vmatpush1.msra.mxu0 0.0
    %1632 = vmatprep.subr.mxu0 0.0
    %1633 = vmatpush1.msra.mxu0 0.0
    %1634 = vmatprep.subr.mxu0 0.0
    %1635 = vmatpush1.msra.mxu0 0.0
    %1636 = vmatprep.subr.mxu0 0.0
    %1637 = vmatpush1.msra.mxu0 0.0
    %1638 = vmatprep.subr.mxu0 0.0
    %1639 = vmatpush1.msra.mxu0 0.0
    %1640 = vmatprep.subr.mxu0 0.0
    %1641 = vmatpush1.msra.mxu0 0.0
    %1642 = vmatprep.subr.mxu0 0.0
    %1643 = vmatpush1.msra.mxu0 0.0
    %1644 = vmatprep.subr.mxu0 0.0
    %1645 = vmatpush1.msra.mxu0 0.0
    %1646 = vmatprep.subr.mxu0 0.0
    %1647 = vmatpush1.msra.mxu0 0.0
    %1648 = vmatprep.mubr.f32.mxu0 0.0
    %1649 = vmatmul.mubr.f32.gmra.mrb[0].mxu0 %v1507
    %v1650 = vpop.f32.mrb[0].mxu0
    %v1651 = vadd.f32 0.0, %v1650
    %v1652 = vpop.f32.mrb[0].mxu0
    %v1653 = vadd.f32 0.0, %v1652
    %1654 = vdwg.mxu0
    %v1655 = vadd.f32 %v1509, %v1580
    %v1656 = vadd.f32 %v1510, %v1582
    %v1657 = vadd.f32 %v1511, %v1651
    %v1658 = vadd.f32 %v1512, %v1653
    %v1659 = vmul.f32 %v1655, 0.5
    %v1660 = vtanh.pop %v1659
    %v1661 = vmul.f32 %v1660, 0.5
    %v1662 = vadd.f32 %v1661, 0.5
    %v1663 = vmul.f32 %v1656, 0.5
    %v1664 = vtanh.pop %v1663
    %v1665 = vmul.f32 %v1664, 0.5
    %v1666 = vadd.f32 %v1665, 0.5
    %v1667 = vtanh.pop %v1657
    %v1668 = vmul.f32 %v1658, 0.5
    %v1669 = vtanh.pop %v1668
    %v1670 = vmul.f32 %v1669, 0.5
    %v1671 = vadd.f32 %v1670, 0.5
    %v1672 = vmul.f32 %v1666, %v1505
    %v1673 = vmul.f32 %v1662, %v1667
    %v1674 = vadd.f32 %v1672, %v1673
    %v1675 = vtanh.pop %v1674
    %v1676 = vmul.f32 %v1671, %v1675
    %s1677 = scalar_lea.vmem [#allocation2], 224
    %v1678 = vld [vmem:[%s1677] sm:$0xff]
    %v1679 = vld [vmem:[%s1677 + $0x8] sm:$0xff]
    %v1680 = vld [vmem:[%s1677 + $0x10] sm:$0xff]
    %v1681 = vld [vmem:[%s1677 + $0x18] sm:$0xff]
    %1682 = vmatprep.subr.mxu0 %v436
    %1683 = vmatpush1.msra.mxu0 %v435
    %1684 = vmatprep.subr.mxu0 %v440
    %1685 = vmatpush1.msra.mxu0 %v439
    %1686 = vmatprep.subr.mxu0 %v444
    %1687 = vmatpush1.msra.mxu0 %v443
    %1688 = vmatprep.subr.mxu0 %v448
    %1689 = vmatpush1.msra.mxu0 %v447
    %1690 = vmatprep.subr.mxu0 %v452
    %1691 = vmatpush1.msra.mxu0 %v451
    %1692 = vmatprep.subr.mxu0 %v456
    %1693 = vmatpush1.msra.mxu0 %v455
    %1694 = vmatprep.subr.mxu0 %v460
    %1695 = vmatpush1.msra.mxu0 %v459
    %1696 = vmatprep.subr.mxu0 %v464
    %1697 = vmatpush1.msra.mxu0 %v463
    %1698 = vmatprep.subr.mxu0 %v468
    %1699 = vmatpush1.msra.mxu0 %v467
    %1700 = vmatprep.subr.mxu0 %v472
    %1701 = vmatpush1.msra.mxu0 %v471
    %1702 = vmatprep.subr.mxu0 %v476
    %1703 = vmatpush1.msra.mxu0 %v475
    %1704 = vmatprep.subr.mxu0 %v480
    %1705 = vmatpush1.msra.mxu0 %v479
    %1706 = vmatprep.subr.mxu0 %v484
    %1707 = vmatpush1.msra.mxu0 %v483
    %1708 = vmatprep.subr.mxu0 %v488
    %1709 = vmatpush1.msra.mxu0 %v487
    %1710 = vmatprep.subr.mxu0 %v492
    %1711 = vmatpush1.msra.mxu0 %v491
    %1712 = vmatprep.subr.mxu0 %v496
    %1713 = vmatpush1.msra.mxu0 %v495
    %1714 = vmatprep.subr.mxu0 0.0
    %1715 = vmatpush1.msra.mxu0 0.0
    %1716 = vmatprep.subr.mxu0 0.0
    %1717 = vmatpush1.msra.mxu0 0.0
    %1718 = vmatprep.subr.mxu0 0.0
    %1719 = vmatpush1.msra.mxu0 0.0
    %1720 = vmatprep.subr.mxu0 0.0
    %1721 = vmatpush1.msra.mxu0 0.0
    %1722 = vmatprep.subr.mxu0 0.0
    %1723 = vmatpush1.msra.mxu0 0.0
    %1724 = vmatprep.subr.mxu0 0.0
    %1725 = vmatpush1.msra.mxu0 0.0
    %1726 = vmatprep.subr.mxu0 0.0
    %1727 = vmatpush1.msra.mxu0 0.0
    %1728 = vmatprep.subr.mxu0 0.0
    %1729 = vmatpush1.msra.mxu0 0.0
    %1730 = vmatprep.subr.mxu0 0.0
    %1731 = vmatpush1.msra.mxu0 0.0
    %1732 = vmatprep.subr.mxu0 0.0
    %1733 = vmatpush1.msra.mxu0 0.0
    %1734 = vmatprep.subr.mxu0 0.0
    %1735 = vmatpush1.msra.mxu0 0.0
    %1736 = vmatprep.subr.mxu0 0.0
    %1737 = vmatpush1.msra.mxu0 0.0
    %1738 = vmatprep.subr.mxu0 0.0
    %1739 = vmatpush1.msra.mxu0 0.0
    %1740 = vmatprep.subr.mxu0 0.0
    %1741 = vmatpush1.msra.mxu0 0.0
    %1742 = vmatprep.subr.mxu0 0.0
    %1743 = vmatpush1.msra.mxu0 0.0
    %1744 = vmatprep.subr.mxu0 0.0
    %1745 = vmatpush1.msra.mxu0 0.0
    %1746 = vmatprep.mubr.f32.mxu0 0.0
    %1747 = vmatmul.mubr.f32.gmra.mrb[0].mxu0 %v1676
    %v1748 = vpop.f32.mrb[0].mxu0
    %v1749 = vadd.f32 0.0, %v1748
    %v1750 = vpop.f32.mrb[0].mxu0
    %v1751 = vadd.f32 0.0, %v1750
    %1752 = vdwg.mxu0
    %1753 = vmatprep.subr.mxu0 %v438
    %1754 = vmatpush1.msra.mxu0 %v437
    %1755 = vmatprep.subr.mxu0 %v442
    %1756 = vmatpush1.msra.mxu0 %v441
    %1757 = vmatprep.subr.mxu0 %v446
    %1758 = vmatpush1.msra.mxu0 %v445
    %1759 = vmatprep.subr.mxu0 %v450
    %1760 = vmatpush1.msra.mxu0 %v449
    %1761 = vmatprep.subr.mxu0 %v454
    %1762 = vmatpush1.msra.mxu0 %v453
    %1763 = vmatprep.subr.mxu0 %v458
    %1764 = vmatpush1.msra.mxu0 %v457
    %1765 = vmatprep.subr.mxu0 %v462
    %1766 = vmatpush1.msra.mxu0 %v461
    %1767 = vmatprep.subr.mxu0 %v466
    %1768 = vmatpush1.msra.mxu0 %v465
    %1769 = vmatprep.subr.mxu0 %v470
    %1770 = vmatpush1.msra.mxu0 %v469
    %1771 = vmatprep.subr.mxu0 %v474
    %1772 = vmatpush1.msra.mxu0 %v473
    %1773 = vmatprep.subr.mxu0 %v478
    %1774 = vmatpush1.msra.mxu0 %v477
    %1775 = vmatprep.subr.mxu0 %v482
    %1776 = vmatpush1.msra.mxu0 %v481
    %1777 = vmatprep.subr.mxu0 %v486
    %1778 = vmatpush1.msra.mxu0 %v485
    %1779 = vmatprep.subr.mxu0 %v490
    %1780 = vmatpush1.msra.mxu0 %v489
    %1781 = vmatprep.subr.mxu0 %v494
    %1782 = vmatpush1.msra.mxu0 %v493
    %1783 = vmatprep.subr.mxu0 %v498
    %1784 = vmatpush1.msra.mxu0 %v497
    %1785 = vmatprep.subr.mxu0 0.0
    %1786 = vmatpush1.msra.mxu0 0.0
    %1787 = vmatprep.subr.mxu0 0.0
    %1788 = vmatpush1.msra.mxu0 0.0
    %1789 = vmatprep.subr.mxu0 0.0
    %1790 = vmatpush1.msra.mxu0 0.0
    %1791 = vmatprep.subr.mxu0 0.0
    %1792 = vmatpush1.msra.mxu0 0.0
    %1793 = vmatprep.subr.mxu0 0.0
    %1794 = vmatpush1.msra.mxu0 0.0
    %1795 = vmatprep.subr.mxu0 0.0
    %1796 = vmatpush1.msra.mxu0 0.0
    %1797 = vmatprep.subr.mxu0 0.0
    %1798 = vmatpush1.msra.mxu0 0.0
    %1799 = vmatprep.subr.mxu0 0.0
    %1800 = vmatpush1.msra.mxu0 0.0
    %1801 = vmatprep.subr.mxu0 0.0
    %1802 = vmatpush1.msra.mxu0 0.0
    %1803 = vmatprep.subr.mxu0 0.0
    %1804 = vmatpush1.msra.mxu0 0.0
    %1805 = vmatprep.subr.mxu0 0.0
    %1806 = vmatpush1.msra.mxu0 0.0
    %1807 = vmatprep.subr.mxu0 0.0
    %1808 = vmatpush1.msra.mxu0 0.0
    %1809 = vmatprep.subr.mxu0 0.0
    %1810 = vmatpush1.msra.mxu0 0.0
    %1811 = vmatprep.subr.mxu0 0.0
    %1812 = vmatpush1.msra.mxu0 0.0
    %1813 = vmatprep.subr.mxu0 0.0
    %1814 = vmatpush1.msra.mxu0 0.0
    %1815 = vmatprep.subr.mxu0 0.0
    %1816 = vmatpush1.msra.mxu0 0.0
    %1817 = vmatprep.mubr.f32.mxu0 0.0
    %1818 = vmatmul.mubr.f32.gmra.mrb[0].mxu0 %v1676
    %v1819 = vpop.f32.mrb[0].mxu0
    %v1820 = vadd.f32 0.0, %v1819
    %v1821 = vpop.f32.mrb[0].mxu0
    %v1822 = vadd.f32 0.0, %v1821
    %1823 = vdwg.mxu0
    %v1824 = vadd.f32 %v1678, %v1749
    %v1825 = vadd.f32 %v1679, %v1751
    %v1826 = vadd.f32 %v1680, %v1820
    %v1827 = vadd.f32 %v1681, %v1822
    %v1828 = vmul.f32 %v1824, 0.5
    %v1829 = vtanh.pop %v1828
    %v1830 = vmul.f32 %v1829, 0.5
    %v1831 = vadd.f32 %v1830, 0.5
    %v1832 = vmul.f32 %v1825, 0.5
    %v1833 = vtanh.pop %v1832
    %v1834 = vmul.f32 %v1833, 0.5
    %v1835 = vadd.f32 %v1834, 0.5
    %v1836 = vtanh.pop %v1826
    %v1837 = vmul.f32 %v1827, 0.5
    %v1838 = vtanh.pop %v1837
    %v1839 = vmul.f32 %v1838, 0.5
    %v1840 = vadd.f32 %v1839, 0.5
    %v1841 = vmul.f32 %v1835, %v1674
    %v1842 = vmul.f32 %v1831, %v1836
    %v1843 = vadd.f32 %v1841, %v1842
    %v1844 = vtanh.pop %v1843
    %v1845 = vmul.f32 %v1840, %v1844
    %v1846 = vld [vmem:[#allocation9] sm:$0xff]
    %v1847 = vld [vmem:[#allocation9 + $0x8] sm:$0xff]
    %v1848 = vld [vmem:[#allocation9 + $0x10] sm:$0xff]
    %v1849 = vld [vmem:[#allocation9 + $0x18] sm:$0xff]
    %v1850 = vld [vmem:[#allocation9 + $0x20] sm:$0xff]
    %v1851 = vld [vmem:[#allocation9 + $0x28] sm:$0xff]
    %v1852 = vld [vmem:[#allocation9 + $0x30] sm:$0xff]
    %v1853 = vld [vmem:[#allocation9 + $0x38] sm:$0xff]
    %v1854 = vld [vmem:[#allocation9 + $0x40] sm:$0xff]
    %v1855 = vld [vmem:[#allocation9 + $0x48] sm:$0xff]
    %v1856 = vld [vmem:[#allocation9 + $0x50] sm:$0xff]
    %v1857 = vld [vmem:[#allocation9 + $0x58] sm:$0xff]
    %v1858 = vld [vmem:[#allocation9 + $0x60] sm:$0xff]
    %v1859 = vld [vmem:[#allocation9 + $0x68] sm:$0xff]
    %v1860 = vld [vmem:[#allocation9 + $0x70] sm:$0xff]
    %v1861 = vld [vmem:[#allocation9 + $0x78] sm:$0xff]
    %v1862 = vld [vmem:[%s5] sm:$0x1]
    %v1864 = vlaneseq
    %v1865 = vshrl.u32 %v1864, 7
    %v1866 = vsub.s32 0, %v1865
    %v1867 = vrot.slane %v1862, %v1866
    %1869 = vmatprep.subr.mxu0 0.0
    %1870 = vmatpush1.msra.mxu0 %v1846
    %1871 = vmatprep.subr.mxu0 0.0
    %1872 = vmatpush1.msra.mxu0 %v1847
    %1873 = vmatprep.subr.mxu0 0.0
    %1874 = vmatpush1.msra.mxu0 %v1848
    %1875 = vmatprep.subr.mxu0 0.0
    %1876 = vmatpush1.msra.mxu0 %v1849
    %1877 = vmatprep.subr.mxu0 0.0
    %1878 = vmatpush1.msra.mxu0 %v1850
    %1879 = vmatprep.subr.mxu0 0.0
    %1880 = vmatpush1.msra.mxu0 %v1851
    %1881 = vmatprep.subr.mxu0 0.0
    %1882 = vmatpush1.msra.mxu0 %v1852
    %1883 = vmatprep.subr.mxu0 0.0
    %1884 = vmatpush1.msra.mxu0 %v1853
    %1885 = vmatprep.subr.mxu0 0.0
    %1886 = vmatpush1.msra.mxu0 %v1854
    %1887 = vmatprep.subr.mxu0 0.0
    %1888 = vmatpush1.msra.mxu0 %v1855
    %1889 = vmatprep.subr.mxu0 0.0
    %1890 = vmatpush1.msra.mxu0 %v1856
    %1891 = vmatprep.subr.mxu0 0.0
    %1892 = vmatpush1.msra.mxu0 %v1857
    %1893 = vmatprep.subr.mxu0 0.0
    %1894 = vmatpush1.msra.mxu0 %v1858
    %1895 = vmatprep.subr.mxu0 0.0
    %1896 = vmatpush1.msra.mxu0 %v1859
    %1897 = vmatprep.subr.mxu0 0.0
    %1898 = vmatpush1.msra.mxu0 %v1860
    %1899 = vmatprep.subr.mxu0 0.0
    %1900 = vmatpush1.msra.mxu0 %v1861
    %1901 = vmatprep.subr.mxu0 0.0
    %1902 = vmatpush1.msra.mxu0 0.0
    %1903 = vmatprep.subr.mxu0 0.0
    %1904 = vmatpush1.msra.mxu0 0.0
    %1905 = vmatprep.subr.mxu0 0.0
    %1906 = vmatpush1.msra.mxu0 0.0
    %1907 = vmatprep.subr.mxu0 0.0
    %1908 = vmatpush1.msra.mxu0 0.0
    %1909 = vmatprep.subr.mxu0 0.0
    %1910 = vmatpush1.msra.mxu0 0.0
    %1911 = vmatprep.subr.mxu0 0.0
    %1912 = vmatpush1.msra.mxu0 0.0
    %1913 = vmatprep.subr.mxu0 0.0
    %1914 = vmatpush1.msra.mxu0 0.0
    %1915 = vmatprep.subr.mxu0 0.0
    %1916 = vmatpush1.msra.mxu0 0.0
    %1917 = vmatprep.subr.mxu0 0.0
    %1918 = vmatpush1.msra.mxu0 0.0
    %1919 = vmatprep.subr.mxu0 0.0
    %1920 = vmatpush1.msra.mxu0 0.0
    %1921 = vmatprep.subr.mxu0 0.0
    %1922 = vmatpush1.msra.mxu0 0.0
    %1923 = vmatprep.subr.mxu0 0.0
    %1924 = vmatpush1.msra.mxu0 0.0
    %1925 = vmatprep.subr.mxu0 0.0
    %1926 = vmatpush1.msra.mxu0 0.0
    %1927 = vmatprep.subr.mxu0 0.0
    %1928 = vmatpush1.msra.mxu0 0.0
    %1929 = vmatprep.subr.mxu0 0.0
    %1930 = vmatpush1.msra.mxu0 0.0
    %1931 = vmatprep.subr.mxu0 0.0
    %1932 = vmatpush1.msra.mxu0 0.0
    %1933 = vmatprep.mubr.f32.mxu0 0.0
    %1934 = vmatmul.mubr.f32.gmra.mrb[0].mxu0 %v1845
    %v1935 = vpop.f32.mrb[0].mxu0
    %v1936 = vadd.f32 %v1867, %v1935
    %v1937 = vpop.f32.mrb[0].mxu0
    %1938 = vdwg.mxu0
    %1939 = vst [vmem:[#allocation11] sm:$0xff] %v1936
    // Predicated region
    $region42: #{tpu_custom_call.1} parent=1 // pred_check
      _
    $region43: #{tpu_custom_call.1} parent=1 // pred_check_branch
      %1941 = sbr.rel (0) target = $region45
    $region44: #{tpu_custom_call.1} parent=1 // pred_region
      %s1943 = ssub.s32 128, 128
      %1944 = vsyncadd [#allocation5], %s1943
      %s1946 = sshll.u32 [#allocation11], 4
      %s1947 = int_to_ptr.vmem [resolvable:$true] %s1946
      %1949 = dma.vmem_to_hbm [thread:$0]  %s1947, 128, %s6, [#allocation5]
    $region45: #{tpu_custom_call.1} parent=1 // pred_fallthru
      _
    // Predicated region
    $region46: #{tpu_custom_call.1} parent=1 // pred_check
      _
    $region47: #{tpu_custom_call.1} parent=1 // pred_check_branch
      %1951 = sbr.rel (0) target = $region49
    $region48: #{tpu_custom_call.1} parent=1 // pred_region
      %1952 = dma.done [#allocation5], 128
    $region49: #{tpu_custom_call.1} parent=1 // pred_fallthru
      _
    %1953 = vsyncpa [#allocation4], 1
    %1954 = vsyncpa [#allocation7], 1
    %1955 = vsyncpa [#allocation10], 1
    %1956 = vsyncpa [#allocation5], 1

</llo_original>
